<compile_context>
chip_gen: v7x
topology: tpu7x:2x2x1
jax: 0.10.0
libtpu: 0.0.40
codegen_flags: <defaults>
</compile_context>

<pallas_src>
from functools import partial
from typing import Iterable, List, Optional

import jax
import jax.numpy as jnp
from jax import lax
from jax.experimental import pallas as pl
from jax.experimental.pallas import tpu as pltpu


# ----------------------------------------------------------------------------
# generation-aware hardware hints
# ----------------------------------------------------------------------------
def _vmem_budget_bytes() -> int:
    """~half of per-core VMEM (v5e/v6e -> 64 MiB, v7x -> 32 MiB); safe fallback."""
    try:
        cap = int(pltpu.get_tpu_info().vmem_capacity_bytes)
    except Exception:
        cap = 64 * 1024 * 1024
    return int(min(cap // 2, 100 * 1024 * 1024))


def _is_multi_tensorcore() -> bool:
    """v7x has 2 TensorCores per chip; give each one at least one output tile."""
    try:
        kind = jax.devices()[0].device_kind.lower()
    except Exception:
        kind = ""
    return "v7" in kind or "7x" in kind


# ----------------------------------------------------------------------------
# Pallas kernel: relu(x @ w + b); x resident, weights tiled over (N, K)
# ----------------------------------------------------------------------------
def _linear_bias_relu_kernel(x_ref, w_ref, b_ref, o_ref, acc_ref, *, tk: int, nk: int):
    # grid = (N // tn, K // tk); axis 0 = output-N tiles ("parallel"),
    # axis 1 = K reduction ("arbitrary", innermost so the output block and the
    # f32 accumulator stay resident across the reduction).
    k = pl.program_id(1)

    @pl.when(k == 0)
    def _():
        # fold the bias into the accumulator init (removes the epilogue add)
        acc_ref[...] = jnp.broadcast_to(
            b_ref[...].astype(jnp.float32), acc_ref.shape)

    if nk == 1:
        x_blk = x_ref[...]
    else:
        # x is fully resident (constant index_map -> single DMA); slice the K chunk.
        x_blk = x_ref[:, pl.ds(pl.multiple_of(k * tk, tk), tk)]

    acc_ref[...] += jnp.dot(x_blk, w_ref[...],
                            preferred_element_type=jnp.float32)

    @pl.when(k == nk - 1)
    def _():
        # epilogue stays in f32 (v5e has no bf16 VALU); cast only on the final store
        o_ref[...] = jnp.maximum(acc_ref[...], 0.0).astype(o_ref.dtype)


def _tile_candidates(dim: int) -> List[int]:
    cands = [dim]
    for t in (2048, 1024, 512, 256, 128):
        if t < dim and dim % t == 0:
            cands.append(t)
    return cands


def _select_tiles(M, K, N, x_itm, w_itm, o_itm, vmem_budget, multi_tc):
    tn_cands = _tile_candidates(N)
    tk_cands = _tile_candidates(K)
    if multi_tc:
        # keep >= 2 output tiles so both TensorCores get work on the parallel axis
        two = [t for t in tn_cands if N // t >= 2]
        if two:
            tn_cands = two

    def fits(tk, tn):
        need = (M * K * x_itm            # resident activations (single buffer)
                + 2 * tk * tn * w_itm    # double-buffered weight tiles
                + 2 * tn * 4             # bias tiles
                + 2 * M * tn * o_itm     # double-buffered output tiles
                + M * tn * 4)            # f32 accumulator scratch
        return need <= 0.9 * vmem_budget

    for tn in tn_cands:          # largest first: longest contiguous weight rows
        for tk in tk_cands:      # largest first: fewest grid steps
            if fits(tk, tn):
                return tk, tn
    return tk_cands[-1], tn_cands[-1]


def linear_relu_pallas(x: jax.Array, w: jax.Array, b: jax.Array) -> jax.Array:
    """relu(x @ w + b) as a Pallas TPU kernel (small-M, HBM-bound regime)."""
    M, K = x.shape
    Kw, N = w.shape
    assert K == Kw, "shape mismatch"
    assert K % 128 == 0 and N % 128 == 0, "lane dims must be 128-aligned"

    vmem_budget = _vmem_budget_bytes()
    tk, tn = _select_tiles(M, K, N, x.dtype.itemsize, w.dtype.itemsize,
                           x.dtype.itemsize, vmem_budget, _is_multi_tensorcore())
    nj, nk = N // tn, K // tk
    b2d = b.reshape(1, N)

    cost = pl.CostEstimate(
        flops=2 * M * K * N,
        transcendentals=0,
        bytes_accessed=(M * K * x.dtype.itemsize + K * N * w.dtype.itemsize
                        + N * b.dtype.itemsize + M * N * x.dtype.itemsize),
    )

    return pl.pallas_call(
        partial(_linear_bias_relu_kernel, tk=tk, nk=nk),
        out_shape=jax.ShapeDtypeStruct((M, N), x.dtype),
        grid_spec=pltpu.PrefetchScalarGridSpec(
            num_scalar_prefetch=0,
            grid=(nj, nk),
            in_specs=[
                # activations: fully resident, one contiguous DMA for the whole grid
                pl.BlockSpec((M, K), lambda j, k: (0, 0)),
                # weights: (tk, tn) tiles, software-pipelined over the K axis
                pl.BlockSpec((tk, tn), lambda j, k: (k, j)),
                # bias: constant over k -> one DMA per output tile
                pl.BlockSpec((1, tn), lambda j, k: (0, j)),
            ],
            out_specs=pl.BlockSpec((M, tn), lambda j, k: (0, j)),
            scratch_shapes=[pltpu.VMEM((M, tn), jnp.float32)],
        ),
        compiler_params=pltpu.CompilerParams(
            dimension_semantics=("parallel", "arbitrary"),
            vmem_limit_bytes=int(vmem_budget),
        ),
        cost_estimate=cost,
    )(x, w, b2d)


# ----------------------------------------------------------------------------
# CapturedGraph equivalent
# ----------------------------------------------------------------------------
class CapturedGraphPallas:
    """JAX/Pallas analogue of CapturedGraph: padded-batch 'replay' of a fixed model."""

    def __init__(
        self,
        w: jax.Array,
        b: jax.Array,
        max_batch_size: int,
        cuda_graph_batch_sizes: Optional[List[int]] = None,
        num_batched_inputs: int = 1,
    ):
        self.w = w
        self.b = b
        self.max_batch_size = max_batch_size
        self.num_batched_inputs = num_batched_inputs
        # Batch rounding at sublane granularity (8 rows f32 / 16 bf16), not 128.
        mult = 8 if w.dtype.itemsize >= 4 else 16
        self.graph_batch_sizes = (
            sorted(cuda_graph_batch_sizes, reverse=True)
            if cuda_graph_batch_sizes is not None
            else self._get_graph_batch_sizes(max_batch_size, multiplier=mult)
        )
        self._input_buffers: List[jax.Array] = []
        self._graphs = {}  # (rounded_bs, *feature_shape) -> jitted replay fn (reads buffer)
        # Buffer update: donates ONLY the buffer; x always comes from outside so
        # it can never alias the donated buffer (fixes the f(donate(a), a) bug).
        self._update = jax.jit(
            lambda buf, xin: lax.dynamic_update_slice(
                buf, xin.astype(buf.dtype), (0,) * buf.ndim),
            donate_argnums=(0,))
        # TODO(synk): no TPU equivalent of CUDAGraph memory pools / true replay;
        # each "graph" is one jitted function compiled at the rounded batch size.
        # TODO(synk): pytree in_spec/out_spec + static-arg hashing not modeled;
        # single batched tensor input / single tensor output only.

    # ---- batch size heuristics (same structure as the PyTorch module) ----
    @staticmethod
    def _get_graph_batch_sizes(
        max_bs: int, extra: Optional[List[int]] = None, multiplier: int = 8
    ) -> List[int]:
        batch_sizes = {1, max_bs, *(extra or [])}
        batch_sizes.update(range(multiplier, max_bs + 1, multiplier))
        return sorted(batch_sizes, reverse=True)

    @staticmethod
    def round_up_to_closest(batch_sizes: Iterable[int], bs: int) -> Optional[int]:
        batch_sizes = list(batch_sizes)
        if bs > max(batch_sizes, default=0):
            return None
        return min(batch_sizes, key=lambda x: (x < bs, abs(x - bs)), default=None)

    def round_to_graph_batch_size(self, bs: int) -> Optional[int]:
        return self.round_up_to_closest(self.graph_batch_sizes, bs)

    # ---- inner model ----
    def _model(self, x: jax.Array) -> jax.Array:
        M, H = x.shape
        O = self.w.shape[1]
        w_bytes = H * O * self.w.dtype.itemsize
        # Pallas only where it can win: lane-aligned dims, at least a sublane of
        # rows, and either a weight stream worth pipelining or a real batch.
        use_pallas = (H % 128 == 0 and O % 128 == 0 and M >= 8
                      and (w_bytes >= (4 << 20) or M >= 64))
        if use_pallas:
            return linear_relu_pallas(x, self.w, self.b)
        return jnp.maximum(jnp.dot(x, self.w) + self.b[None, :], 0.0)

    # ---- one "captured graph" = one jitted model call at the rounded bs ----
    def _make_replay(self, rounded: int):
        max_bs = self.max_batch_size

        def replay(buf):
            # read-only view of the persistent buffer at the captured batch size
            if rounded == max_bs:
                x_pad = buf
            else:
                x_pad = lax.slice(buf, (0,) * buf.ndim,
                                  (rounded,) + buf.shape[1:])
            return self._model(x_pad)          # padded output, shape (rounded, O)

        return jax.jit(replay)                 # keyed on rounded bs only

    # ---- capture ----
    def capture_graph(self, x_example: jax.Array):
        assert x_example.ndim > 1, "Expecting at least a 2D batched input tensor."
        assert self.max_batch_size >= x_example.shape[0], "Max batch size too small."
        # buffer = first row repeated max_batch_size times (repeat_interleave dim 0)
        buf = jnp.repeat(x_example[:1], self.max_batch_size, axis=0)
        self._input_buffers = [buf]
        feat = tuple(x_example.shape[1:])
        # warm-up at max batch size (CudaGraphWarmUpPhase analogue)
        jax.block_until_ready(self._model(buf))
        for bs in self.graph_batch_sizes:
            replay = self._make_replay(bs)
            self._graphs[(bs,) + feat] = replay
            # "capture": trace/compile the padded-batch model once at this size.
            # replay only reads the buffer (no donation involved here).
            jax.block_until_ready(replay(self._input_buffers[0]))

    # ---- forward (replay path) ----
    def __call__(self, x: jax.Array) -> jax.Array:
        bs = x.shape[0]
        rounded = self.round_to_graph_batch_size(bs)
        key = ((rounded,) + tuple(x.shape[1:])) if rounded is not None else None
        if key is None or key not in self._graphs:
            return self._model(x)  # fallback: eager model call (no captured graph)
        # 1) buffer[:bs] = x   (persistent buffer donated -> in-place update)
        self._input_buffers[0] = self._update(self._input_buffers[0], x)
        # 2) replay the captured model at the rounded batch size (single compile/rbs)
        out_pad = self._graphs[key](self._input_buffers[0])
        # 3) slice back to the true batch size (analogue of out[:bs].clone())
        return out_pad[:bs]


# ----------------------------------------------------------------------------
# main
# ----------------------------------------------------------------------------
if __name__ == "__main__":
    key = jax.random.PRNGKey(0)
    k_w, k_b, k_x = jax.random.split(key, 3)

    MAX_BS = 16    # graph batch sizes -> {16, 8, 1} (sublane-granularity rounding)
    HIDDEN = 1024  # lane-dense K (single resident K block)
    OUT = 1024     # lane-dense N (weight stream = 4 MiB -> Pallas hot path)
    BS = 11        # actual batch size -> rounded up to 16

    w = jax.random.normal(k_w, (HIDDEN, OUT), dtype=jnp.float32) * 0.05
    b = jax.random.normal(k_b, (OUT,), dtype=jnp.float32) * 0.1
    x_example = jax.random.normal(k_x, (BS, HIDDEN), dtype=jnp.float32)

    wrapper = CapturedGraphPallas(w, b, max_batch_size=MAX_BS)
    wrapper.capture_graph(x_example)

    out = wrapper(x_example)
    out = jax.block_until_ready(out)

    # reference (HIGHEST precision so the check is robust to MXU f32 decomposition)
    ref = jnp.maximum(
        jnp.dot(x_example, w, precision=lax.Precision.HIGHEST) + b[None, :], 0.0
    )
    assert out.shape == (BS, OUT), f"bad shape {out.shape}"
    assert jnp.allclose(out, ref, atol=5e-2, rtol=2e-2), "mismatch vs reference"

    print("KERNEL_OK")
</pallas_src>

<mosaic_0001>
module attributes {stable_mosaic.version = 11 : i64} {
  func.func @_linear_bias_relu_kernel(%arg0: i32, %arg1: i32, %arg2: memref<16x1024xf32, #tpu.memory_space<vmem>>, %arg3: memref<1024x1024xf32, #tpu.memory_space<vmem>>, %arg4: memref<1x1024xf32, #tpu.memory_space<vmem>>, %arg5: memref<16x1024xf32, #tpu.memory_space<vmem>>, %arg6: memref<16x1024xf32, #tpu.memory_space<vmem>>) attributes {dimension_semantics = [#tpu.dimension_semantics<parallel>, #tpu.dimension_semantics<arbitrary>], iteration_bounds = array<i64: 1, 1>, scalar_prefetch = 0 : i64, scratch_operands = 1 : i64, tpu.core_type = #tpu.core_type<tc>, window_params = [{pipeline_mode = #tpu.pipeline_mode<synchronous>, transform_indices = @transform_0, window_bounds = array<i64: 16, 1024>}, {transform_indices = @transform_1, window_bounds = array<i64: 1024, 1024>}, {transform_indices = @transform_2, window_bounds = array<i64: 1, 1024>}, {transform_indices = @transform_3, window_bounds = array<i64: 16, 1024>}]} {
    %c0_i32 = arith.constant 0 : i32
    %0 = arith.cmpi eq, %arg1, %c0_i32 : i32
    %1 = arith.extui %0 : i1 to i32
    %c0_i32_0 = arith.constant 0 : i32
    %2 = arith.cmpi ne, %1, %c0_i32_0 : i32
    scf.if %2 {
      %c0_10 = arith.constant 0 : index
      %c0_11 = arith.constant 0 : index
      %12 = vector.load %arg4[%c0_10, %c0_11] : memref<1x1024xf32, #tpu.memory_space<vmem>>, vector<1x1024xf32>
      %13 = vector.shape_cast %12 : vector<1x1024xf32> to vector<1x1024xf32>
      %14 = vector.broadcast %13 : vector<1x1024xf32> to vector<16x1024xf32>
      %c0_12 = arith.constant 0 : index
      %c0_13 = arith.constant 0 : index
      %15 = vector.load %arg6[%c0_12, %c0_13] : memref<16x1024xf32, #tpu.memory_space<vmem>>, vector<16x1024xf32>
      tpu.vector_store %arg6[%c0_12, %c0_13], %14 {strides = array<i32>} : memref<16x1024xf32, #tpu.memory_space<vmem>>, vector<16x1024xf32>,
    } else {
    }
    %c0 = arith.constant 0 : index
    %c0_1 = arith.constant 0 : index
    %3 = vector.load %arg2[%c0, %c0_1] : memref<16x1024xf32, #tpu.memory_space<vmem>>, vector<16x1024xf32>
    %c0_2 = arith.constant 0 : index
    %c0_3 = arith.constant 0 : index
    %4 = vector.load %arg6[%c0_2, %c0_3] : memref<16x1024xf32, #tpu.memory_space<vmem>>, vector<16x1024xf32>
    %c0_4 = arith.constant 0 : index
    %c0_5 = arith.constant 0 : index
    %5 = vector.load %arg3[%c0_4, %c0_5] : memref<1024x1024xf32, #tpu.memory_space<vmem>>, vector<1024x1024xf32>
    %cst = arith.constant dense<0.000000e+00> : vector<16x1024xf32>
    %6 = tpu.matmul %3, %5, %cst {dimension_numbers = #tpu.dot_dimension_numbers<[1], [0], [0], [1], [0, 0, 1, 1], [], []>} : vector<16x1024xf32>, vector<1024x1024xf32>, vector<16x1024xf32> -> vector<16x1024xf32>
    %7 = arith.addf %4, %6 : vector<16x1024xf32>
    %c0_6 = arith.constant 0 : index
    %c0_7 = arith.constant 0 : index
    %8 = vector.load %arg6[%c0_6, %c0_7] : memref<16x1024xf32, #tpu.memory_space<vmem>>, vector<16x1024xf32>
    tpu.vector_store %arg6[%c0_6, %c0_7], %7 {strides = array<i32>} : memref<16x1024xf32, #tpu.memory_space<vmem>>, vector<16x1024xf32>,
    %c0_i32_8 = arith.constant 0 : i32
    %9 = arith.cmpi eq, %arg1, %c0_i32_8 : i32
    %10 = arith.extui %9 : i1 to i32
    %c0_i32_9 = arith.constant 0 : i32
    %11 = arith.cmpi ne, %10, %c0_i32_9 : i32
    scf.if %11 {
      %c0_10 = arith.constant 0 : index
      %c0_11 = arith.constant 0 : index
      %12 = vector.load %arg6[%c0_10, %c0_11] : memref<16x1024xf32, #tpu.memory_space<vmem>>, vector<16x1024xf32>
      %cst_12 = arith.constant 0.000000e+00 : f32
      %13 = vector.broadcast %cst_12 : f32 to vector<16x1024xf32>
      %14 = arith.maximumf %12, %13 : vector<16x1024xf32>
      %c0_13 = arith.constant 0 : index
      %c0_14 = arith.constant 0 : index
      %15 = vector.load %arg5[%c0_13, %c0_14] : memref<16x1024xf32, #tpu.memory_space<vmem>>, vector<16x1024xf32>
      tpu.vector_store %arg5[%c0_13, %c0_14], %14 {strides = array<i32>} : memref<16x1024xf32, #tpu.memory_space<vmem>>, vector<16x1024xf32>,
    } else {
    }
    return
  }
  func.func @transform_0(%arg0: i32, %arg1: i32) -> (i32, i32) {
    %c0_i32 = arith.constant 0 : i32
    %c0_i32_0 = arith.constant 0 : i32
    %c0_i32_1 = arith.constant 0 : i32
    return %c0_i32, %c0_i32_0 : i32, i32
  }
  func.func @transform_1(%arg0: i32, %arg1: i32) -> (i32, i32) {
    %c0_i32 = arith.constant 0 : i32
    return %arg1, %arg0 : i32, i32
  }
  func.func @transform_2(%arg0: i32, %arg1: i32) -> (i32, i32) {
    %c0_i32 = arith.constant 0 : i32
    %c0_i32_0 = arith.constant 0 : i32
    return %c0_i32, %arg0 : i32, i32
  }
  func.func @transform_3(%arg0: i32, %arg1: i32) -> (i32, i32) {
    %c0_i32 = arith.constant 0 : i32
    %c0_i32_0 = arith.constant 0 : i32
    return %c0_i32, %arg0 : i32, i32
  }
}

</mosaic_0001>

<llo_original>
// kernel: tpu_custom_call.1
$region0: #{tpu_custom_call.1}
  #allocation0 [shape = 'u32[]', space=smem, size = 0x4, offset = 0x4, fixed_abs, tag = 'smem constant byte address 0x4 - core index']
  #allocation1 [shape = 'u32[144,128]{1,0:T(1,128)}', space=vmem, size = 0x12000, scoped, tag = 'internal scratch']
  #allocation2 [shape = 'f32[16,1024]{1,0:T(8,128)}', space=vmem, size = 0x10000, scoped, tag = 'scratch operand']
  %s0 = inlined_call_operand.hbm [shape: f32[16,1024], index: 0, kind: input, shape index: {}]
  %s1 = inlined_call_operand.hbm [shape: f32[1024,1024], index: 1, kind: input, shape index: {}]
  %s2 = inlined_call_operand.hbm [shape: f32[1,1024], index: 2, kind: input, shape index: {}]
  %s3 = inlined_call_operand.hbm [shape: f32[16,1024], index: 3, kind: output, shape index: {}]
  %s4 = sld [smem:[#allocation0]]
  $region42: #{tpu_custom_call.1} parent=0
    _
  %s6 = ssub.s32 1, %s4
  %s7 = scalar_select 0, %s6, %s4
  $region1: #{tpu_custom_call.1} parent=0
    #allocation3 [shape = 'u8[65536]{0}', space=vmem, size = 0x10000, scoped, tag = 'input window, operand 0, single buffered']
    #allocation4 [shape = 's32[1]{0}', space=sflag, size = 0x4, scoped, tag = 'scoped memory for tpu_custom_call.1']
    #allocation5 [shape = 's32[1]{0}', space=sflag, size = 0x4, scoped, tag = 'scoped memory for tpu_custom_call.1']
    #allocation6 [shape = 'u8[4194304]{0}', space=vmem, size = 0x400000, scoped, tag = 'input window, operand 1, single buffered']
    #allocation7 [shape = 's32[1]{0}', space=sflag, size = 0x4, scoped, tag = 'scoped memory for tpu_custom_call.1']
    #allocation8 [shape = 'u8[4096]{0}', space=vmem, size = 0x1000, scoped, tag = 'input window, operand 2, single buffered']
    #allocation9 [shape = 'u8[65536]{0}', space=vmem, size = 0x10000, scoped, tag = 'output window, operand 0, single buffered']
    %8 = vsyncpa [#allocation4], 0
    %9 = vsyncpa [#allocation7], 0
    %10 = vsyncpa [#allocation5], 0
    // Predicated region
    $region2: #{tpu_custom_call.1} parent=1 // pred_check
      _
    $region3: #{tpu_custom_call.1} parent=1 // pred_check_branch
      %12 = sbr.rel (0) target = $region5
    $region4: #{tpu_custom_call.1} parent=1 // pred_region
      %s14 = ssub.s32 2048, 2048
      %15 = vsyncadd [#allocation4], %s14
      %s16 = sshll.u32 [#allocation3], 4
      %s17 = int_to_ptr.vmem [resolvable:$true] %s16
      %22 = dma.hbm_to_vmem [thread:$0]  %s0, 2048, %s17, [#allocation4], 1024, 1024, 64
    $region5: #{tpu_custom_call.1} parent=1 // pred_fallthru
      _
    // Predicated region
    $region6: #{tpu_custom_call.1} parent=1 // pred_check
      _
    $region7: #{tpu_custom_call.1} parent=1 // pred_check_branch
      %24 = sbr.rel (0) target = $region9
    $region8: #{tpu_custom_call.1} parent=1 // pred_region
      %s26 = ssub.s32 131072, 131072
      %27 = vsyncadd [#allocation7], %s26
      %s28 = sshll.u32 [#allocation6], 4
      %s29 = int_to_ptr.vmem [resolvable:$true] %s28
      %34 = dma.hbm_to_vmem [thread:$0]  %s1, 131072, %s29, [#allocation7], 1024, 1024, 64
    $region9: #{tpu_custom_call.1} parent=1 // pred_fallthru
      _
    // Predicated region
    $region10: #{tpu_custom_call.1} parent=1 // pred_check
      _
    $region11: #{tpu_custom_call.1} parent=1 // pred_check_branch
      %36 = sbr.rel (0) target = $region13
    $region12: #{tpu_custom_call.1} parent=1 // pred_region
      %s38 = ssub.s32 128, 128
      %39 = vsyncadd [#allocation7], %s38
      %s41 = sshll.u32 [#allocation8], 4
      %s42 = int_to_ptr.vmem [resolvable:$true] %s41
      %44 = dma.hbm_to_vmem [thread:$0]  %s2, 128, %s42, [#allocation7]
    $region13: #{tpu_custom_call.1} parent=1 // pred_fallthru
      _
    // Predicated region
    $region14: #{tpu_custom_call.1} parent=1 // pred_check
      _
    $region15: #{tpu_custom_call.1} parent=1 // pred_check_branch
      %46 = sbr.rel (0) target = $region17
    $region16: #{tpu_custom_call.1} parent=1 // pred_region
      %47 = dma.done [#allocation4], 2048
    $region17: #{tpu_custom_call.1} parent=1 // pred_fallthru
      _
    // Predicated region
    $region18: #{tpu_custom_call.1} parent=1 // pred_check
      _
    $region19: #{tpu_custom_call.1} parent=1 // pred_check_branch
      %49 = sbr.rel (0) target = $region21
    $region20: #{tpu_custom_call.1} parent=1 // pred_region
      %50 = dma.done [#allocation7], 131072
    $region21: #{tpu_custom_call.1} parent=1 // pred_fallthru
      _
    // Predicated region
    $region22: #{tpu_custom_call.1} parent=1 // pred_check
      _
    $region23: #{tpu_custom_call.1} parent=1 // pred_check_branch
      %52 = sbr.rel (0) target = $region25
    $region24: #{tpu_custom_call.1} parent=1 // pred_region
      %53 = dma.done [#allocation7], 128
    $region25: #{tpu_custom_call.1} parent=1 // pred_fallthru
      _
    %p54 = scmp.eq.s32.totalorder 0, 0
    // Predicated region
    $region26: #{tpu_custom_call.1} parent=1 // pred_check
      %p55 = pneg %p54
    $region27: #{tpu_custom_call.1} parent=1 // pred_check_branch
      %57 = sbr.rel (%p55) target = $region29
    $region28: #{tpu_custom_call.1} parent=1 // pred_region
      %v58 = vld [vmem:[#allocation8] sm:$0xff]
      %v60 = vlaneseq
      %v61 = vshrl.u32 %v60, 7
      %v62 = vsub.s32 0, %v61
      %v63 = vrot.slane %v58, %v62
      %v64 = vlaneseq
      %v65 = vshrl.u32 %v64, 7
      %v66 = vsub.s32 1, %v65
      %v67 = vrot.slane %v58, %v66
      %v68 = vlaneseq
      %v69 = vshrl.u32 %v68, 7
      %v70 = vsub.s32 2, %v69
      %v71 = vrot.slane %v58, %v70
      %v72 = vlaneseq
      %v73 = vshrl.u32 %v72, 7
      %v74 = vsub.s32 3, %v73
      %v75 = vrot.slane %v58, %v74
      %v76 = vlaneseq
      %v77 = vshrl.u32 %v76, 7
      %v78 = vsub.s32 4, %v77
      %v79 = vrot.slane %v58, %v78
      %v80 = vlaneseq
      %v81 = vshrl.u32 %v80, 7
      %v82 = vsub.s32 5, %v81
      %v83 = vrot.slane %v58, %v82
      %v84 = vlaneseq
      %v85 = vshrl.u32 %v84, 7
      %v86 = vsub.s32 6, %v85
      %v87 = vrot.slane %v58, %v86
      %v88 = vlaneseq
      %v89 = vshrl.u32 %v88, 7
      %v90 = vsub.s32 7, %v89
      %v91 = vrot.slane %v58, %v90
      %100 = vst [vmem:[#allocation2] sm:$0xff] %v63
      %101 = vst [vmem:[#allocation2 + $0x8] sm:$0xff] %v67
      %102 = vst [vmem:[#allocation2 + $0x10] sm:$0xff] %v71
      %103 = vst [vmem:[#allocation2 + $0x18] sm:$0xff] %v75
      %104 = vst [vmem:[#allocation2 + $0x20] sm:$0xff] %v79
      %105 = vst [vmem:[#allocation2 + $0x28] sm:$0xff] %v83
      %106 = vst [vmem:[#allocation2 + $0x30] sm:$0xff] %v87
      %107 = vst [vmem:[#allocation2 + $0x38] sm:$0xff] %v91
      %108 = vst [vmem:[#allocation2 + $0x40] sm:$0xff] %v63
      %109 = vst [vmem:[#allocation2 + $0x48] sm:$0xff] %v67
      %110 = vst [vmem:[#allocation2 + $0x50] sm:$0xff] %v71
      %111 = vst [vmem:[#allocation2 + $0x58] sm:$0xff] %v75
      %112 = vst [vmem:[#allocation2 + $0x60] sm:$0xff] %v79
      %113 = vst [vmem:[#allocation2 + $0x68] sm:$0xff] %v83
      %114 = vst [vmem:[#allocation2 + $0x70] sm:$0xff] %v87
      %115 = vst [vmem:[#allocation2 + $0x78] sm:$0xff] %v91
    $region29: #{tpu_custom_call.1} parent=1 // pred_fallthru
      _
    %v116 = vld [vmem:[#allocation3] sm:$0xff]
    %v117 = vld [vmem:[#allocation3 + $0x8] sm:$0xff]
    %v118 = vld [vmem:[#allocation3 + $0x10] sm:$0xff]
    %v119 = vld [vmem:[#allocation3 + $0x18] sm:$0xff]
    %v120 = vld [vmem:[#allocation3 + $0x20] sm:$0xff]
    %v121 = vld [vmem:[#allocation3 + $0x28] sm:$0xff]
    %v122 = vld [vmem:[#allocation3 + $0x30] sm:$0xff]
    %v123 = vld [vmem:[#allocation3 + $0x38] sm:$0xff]
    %v124 = vld [vmem:[#allocation3 + $0x40] sm:$0xff]
    %v125 = vld [vmem:[#allocation3 + $0x48] sm:$0xff]
    %v126 = vld [vmem:[#allocation3 + $0x50] sm:$0xff]
    %v127 = vld [vmem:[#allocation3 + $0x58] sm:$0xff]
    %v128 = vld [vmem:[#allocation3 + $0x60] sm:$0xff]
    %v129 = vld [vmem:[#allocation3 + $0x68] sm:$0xff]
    %v130 = vld [vmem:[#allocation3 + $0x70] sm:$0xff]
    %v131 = vld [vmem:[#allocation3 + $0x78] sm:$0xff]
    %v132 = vld [vmem:[#allocation2] sm:$0xff]
    %v133 = vld [vmem:[#allocation2 + $0x8] sm:$0xff]
    %v134 = vld [vmem:[#allocation2 + $0x10] sm:$0xff]
    %v135 = vld [vmem:[#allocation2 + $0x18] sm:$0xff]
    %v136 = vld [vmem:[#allocation2 + $0x20] sm:$0xff]
    %v137 = vld [vmem:[#allocation2 + $0x28] sm:$0xff]
    %v138 = vld [vmem:[#allocation2 + $0x30] sm:$0xff]
    %v139 = vld [vmem:[#allocation2 + $0x38] sm:$0xff]
    %v140 = vld [vmem:[#allocation2 + $0x40] sm:$0xff]
    %v141 = vld [vmem:[#allocation2 + $0x48] sm:$0xff]
    %v142 = vld [vmem:[#allocation2 + $0x50] sm:$0xff]
    %v143 = vld [vmem:[#allocation2 + $0x58] sm:$0xff]
    %v144 = vld [vmem:[#allocation2 + $0x60] sm:$0xff]
    %v145 = vld [vmem:[#allocation2 + $0x68] sm:$0xff]
    %v146 = vld [vmem:[#allocation2 + $0x70] sm:$0xff]
    %v147 = vld [vmem:[#allocation2 + $0x78] sm:$0xff]
    %v148 = vld [vmem:[#allocation6] sm:$0xff]
    %v149 = vld [vmem:[#allocation6 + $0x8] sm:$0xff]
    %v150 = vld [vmem:[#allocation6 + $0x10] sm:$0xff]
    %v151 = vld [vmem:[#allocation6 + $0x18] sm:$0xff]
    %v152 = vld [vmem:[#allocation6 + $0x20] sm:$0xff]
    %v153 = vld [vmem:[#allocation6 + $0x28] sm:$0xff]
    %v154 = vld [vmem:[#allocation6 + $0x30] sm:$0xff]
    %v155 = vld [vmem:[#allocation6 + $0x38] sm:$0xff]
    %v156 = vld [vmem:[#allocation6 + $0x40] sm:$0xff]
    %v157 = vld [vmem:[#allocation6 + $0x48] sm:$0xff]
    %v158 = vld [vmem:[#allocation6 + $0x50] sm:$0xff]
    %v159 = vld [vmem:[#allocation6 + $0x58] sm:$0xff]
    %v160 = vld [vmem:[#allocation6 + $0x60] sm:$0xff]
    %v161 = vld [vmem:[#allocation6 + $0x68] sm:$0xff]
    %v162 = vld [vmem:[#allocation6 + $0x70] sm:$0xff]
    %v163 = vld [vmem:[#allocation6 + $0x78] sm:$0xff]
    %v164 = vld [vmem:[#allocation6 + $0x80] sm:$0xff]
    %v165 = vld [vmem:[#allocation6 + $0x88] sm:$0xff]
    %v166 = vld [vmem:[#allocation6 + $0x90] sm:$0xff]
    %v167 = vld [vmem:[#allocation6 + $0x98] sm:$0xff]
    %v168 = vld [vmem:[#allocation6 + $0xa0] sm:$0xff]
    %v169 = vld [vmem:[#allocation6 + $0xa8] sm:$0xff]
    %v170 = vld [vmem:[#allocation6 + $0xb0] sm:$0xff]
    %v171 = vld [vmem:[#allocation6 + $0xb8] sm:$0xff]
    %v172 = vld [vmem:[#allocation6 + $0xc0] sm:$0xff]
    %v173 = vld [vmem:[#allocation6 + $0xc8] sm:$0xff]
    %v174 = vld [vmem:[#allocation6 + $0xd0] sm:$0xff]
    %v175 = vld [vmem:[#allocation6 + $0xd8] sm:$0xff]
    %v176 = vld [vmem:[#allocation6 + $0xe0] sm:$0xff]
    %v177 = vld [vmem:[#allocation6 + $0xe8] sm:$0xff]
    %v178 = vld [vmem:[#allocation6 + $0xf0] sm:$0xff]
    %v179 = vld [vmem:[#allocation6 + $0xf8] sm:$0xff]
    %v180 = vld [vmem:[#allocation6 + $0x100] sm:$0xff]
    %v181 = vld [vmem:[#allocation6 + $0x108] sm:$0xff]
    %v182 = vld [vmem:[#allocation6 + $0x110] sm:$0xff]
    %v183 = vld [vmem:[#allocation6 + $0x118] sm:$0xff]
    %v184 = vld [vmem:[#allocation6 + $0x120] sm:$0xff]
    %v185 = vld [vmem:[#allocation6 + $0x128] sm:$0xff]
    %v186 = vld [vmem:[#allocation6 + $0x130] sm:$0xff]
    %v187 = vld [vmem:[#allocation6 + $0x138] sm:$0xff]
    %v188 = vld [vmem:[#allocation6 + $0x140] sm:$0xff]
    %v189 = vld [vmem:[#allocation6 + $0x148] sm:$0xff]
    %v190 = vld [vmem:[#allocation6 + $0x150] sm:$0xff]
    %v191 = vld [vmem:[#allocation6 + $0x158] sm:$0xff]
    %v192 = vld [vmem:[#allocation6 + $0x160] sm:$0xff]
    %v193 = vld [vmem:[#allocation6 + $0x168] sm:$0xff]
    %v194 = vld [vmem:[#allocation6 + $0x170] sm:$0xff]
    %v195 = vld [vmem:[#allocation6 + $0x178] sm:$0xff]
    %v196 = vld [vmem:[#allocation6 + $0x180] sm:$0xff]
    %v197 = vld [vmem:[#allocation6 + $0x188] sm:$0xff]
    %v198 = vld [vmem:[#allocation6 + $0x190] sm:$0xff]
    %v199 = vld [vmem:[#allocation6 + $0x198] sm:$0xff]
    %v200 = vld [vmem:[#allocation6 + $0x1a0] sm:$0xff]
    %v201 = vld [vmem:[#allocation6 + $0x1a8] sm:$0xff]
    %v202 = vld [vmem:[#allocation6 + $0x1b0] sm:$0xff]
    %v203 = vld [vmem:[#allocation6 + $0x1b8] sm:$0xff]
    %v204 = vld [vmem:[#allocation6 + $0x1c0] sm:$0xff]
    %v205 = vld [vmem:[#allocation6 + $0x1c8] sm:$0xff]
    %v206 = vld [vmem:[#allocation6 + $0x1d0] sm:$0xff]
    %v207 = vld [vmem:[#allocation6 + $0x1d8] sm:$0xff]
    %v208 = vld [vmem:[#allocation6 + $0x1e0] sm:$0xff]
    %v209 = vld [vmem:[#allocation6 + $0x1e8] sm:$0xff]
    %v210 = vld [vmem:[#allocation6 + $0x1f0] sm:$0xff]
    %v211 = vld [vmem:[#allocation6 + $0x1f8] sm:$0xff]
    %v212 = vld [vmem:[#allocation6 + $0x200] sm:$0xff]
    %v213 = vld [vmem:[#allocation6 + $0x208] sm:$0xff]
    %v214 = vld [vmem:[#allocation6 + $0x210] sm:$0xff]
    %v215 = vld [vmem:[#allocation6 + $0x218] sm:$0xff]
    %v216 = vld [vmem:[#allocation6 + $0x220] sm:$0xff]
    %v217 = vld [vmem:[#allocation6 + $0x228] sm:$0xff]
    %v218 = vld [vmem:[#allocation6 + $0x230] sm:$0xff]
    %v219 = vld [vmem:[#allocation6 + $0x238] sm:$0xff]
    %v220 = vld [vmem:[#allocation6 + $0x240] sm:$0xff]
    %v221 = vld [vmem:[#allocation6 + $0x248] sm:$0xff]
    %v222 = vld [vmem:[#allocation6 + $0x250] sm:$0xff]
    %v223 = vld [vmem:[#allocation6 + $0x258] sm:$0xff]
    %v224 = vld [vmem:[#allocation6 + $0x260] sm:$0xff]
    %v225 = vld [vmem:[#allocation6 + $0x268] sm:$0xff]
    %v226 = vld [vmem:[#allocation6 + $0x270] sm:$0xff]
    %v227 = vld [vmem:[#allocation6 + $0x278] sm:$0xff]
    %v228 = vld [vmem:[#allocation6 + $0x280] sm:$0xff]
    %v229 = vld [vmem:[#allocation6 + $0x288] sm:$0xff]
    %v230 = vld [vmem:[#allocation6 + $0x290] sm:$0xff]
    %v231 = vld [vmem:[#allocation6 + $0x298] sm:$0xff]
    %v232 = vld [vmem:[#allocation6 + $0x2a0] sm:$0xff]
    %v233 = vld [vmem:[#allocation6 + $0x2a8] sm:$0xff]
    %v234 = vld [vmem:[#allocation6 + $0x2b0] sm:$0xff]
    %v235 = vld [vmem:[#allocation6 + $0x2b8] sm:$0xff]
    %v236 = vld [vmem:[#allocation6 + $0x2c0] sm:$0xff]
    %v237 = vld [vmem:[#allocation6 + $0x2c8] sm:$0xff]
    %v238 = vld [vmem:[#allocation6 + $0x2d0] sm:$0xff]
    %v239 = vld [vmem:[#allocation6 + $0x2d8] sm:$0xff]
    %v240 = vld [vmem:[#allocation6 + $0x2e0] sm:$0xff]
    %v241 = vld [vmem:[#allocation6 + $0x2e8] sm:$0xff]
    %v242 = vld [vmem:[#allocation6 + $0x2f0] sm:$0xff]
    %v243 = vld [vmem:[#allocation6 + $0x2f8] sm:$0xff]
    %v244 = vld [vmem:[#allocation6 + $0x300] sm:$0xff]
    %v245 = vld [vmem:[#allocation6 + $0x308] sm:$0xff]
    %v246 = vld [vmem:[#allocation6 + $0x310] sm:$0xff]
    %v247 = vld [vmem:[#allocation6 + $0x318] sm:$0xff]
    %v248 = vld [vmem:[#allocation6 + $0x320] sm:$0xff]
    %v249 = vld [vmem:[#allocation6 + $0x328] sm:$0xff]
    %v250 = vld [vmem:[#allocation6 + $0x330] sm:$0xff]
    %v251 = vld [vmem:[#allocation6 + $0x338] sm:$0xff]
    %v252 = vld [vmem:[#allocation6 + $0x340] sm:$0xff]
    %v253 = vld [vmem:[#allocation6 + $0x348] sm:$0xff]
    %v254 = vld [vmem:[#allocation6 + $0x350] sm:$0xff]
    %v255 = vld [vmem:[#allocation6 + $0x358] sm:$0xff]
    %v256 = vld [vmem:[#allocation6 + $0x360] sm:$0xff]
    %v257 = vld [vmem:[#allocation6 + $0x368] sm:$0xff]
    %v258 = vld [vmem:[#allocation6 + $0x370] sm:$0xff]
    %v259 = vld [vmem:[#allocation6 + $0x378] sm:$0xff]
    %v260 = vld [vmem:[#allocation6 + $0x380] sm:$0xff]
    %v261 = vld [vmem:[#allocation6 + $0x388] sm:$0xff]
    %v262 = vld [vmem:[#allocation6 + $0x390] sm:$0xff]
    %v263 = vld [vmem:[#allocation6 + $0x398] sm:$0xff]
    %v264 = vld [vmem:[#allocation6 + $0x3a0] sm:$0xff]
    %v265 = vld [vmem:[#allocation6 + $0x3a8] sm:$0xff]
    %v266 = vld [vmem:[#allocation6 + $0x3b0] sm:$0xff]
    %v267 = vld [vmem:[#allocation6 + $0x3b8] sm:$0xff]
    %v268 = vld [vmem:[#allocation6 + $0x3c0] sm:$0xff]
    %v269 = vld [vmem:[#allocation6 + $0x3c8] sm:$0xff]
    %v270 = vld [vmem:[#allocation6 + $0x3d0] sm:$0xff]
    %v271 = vld [vmem:[#allocation6 + $0x3d8] sm:$0xff]
    %v272 = vld [vmem:[#allocation6 + $0x3e0] sm:$0xff]
    %v273 = vld [vmem:[#allocation6 + $0x3e8] sm:$0xff]
    %v274 = vld [vmem:[#allocation6 + $0x3f0] sm:$0xff]
    %v275 = vld [vmem:[#allocation6 + $0x3f8] sm:$0xff]
    %v276 = vld [vmem:[#allocation6 + $0x400] sm:$0xff]
    %v277 = vld [vmem:[#allocation6 + $0x408] sm:$0xff]
    %v278 = vld [vmem:[#allocation6 + $0x410] sm:$0xff]
    %v279 = vld [vmem:[#allocation6 + $0x418] sm:$0xff]
    %v280 = vld [vmem:[#allocation6 + $0x420] sm:$0xff]
    %v281 = vld [vmem:[#allocation6 + $0x428] sm:$0xff]
    %v282 = vld [vmem:[#allocation6 + $0x430] sm:$0xff]
    %v283 = vld [vmem:[#allocation6 + $0x438] sm:$0xff]
    %v284 = vld [vmem:[#allocation6 + $0x440] sm:$0xff]
    %v285 = vld [vmem:[#allocation6 + $0x448] sm:$0xff]
    %v286 = vld [vmem:[#allocation6 + $0x450] sm:$0xff]
    %v287 = vld [vmem:[#allocation6 + $0x458] sm:$0xff]
    %v288 = vld [vmem:[#allocation6 + $0x460] sm:$0xff]
    %v289 = vld [vmem:[#allocation6 + $0x468] sm:$0xff]
    %v290 = vld [vmem:[#allocation6 + $0x470] sm:$0xff]
    %v291 = vld [vmem:[#allocation6 + $0x478] sm:$0xff]
    %v292 = vld [vmem:[#allocation6 + $0x480] sm:$0xff]
    %v293 = vld [vmem:[#allocation6 + $0x488] sm:$0xff]
    %v294 = vld [vmem:[#allocation6 + $0x490] sm:$0xff]
    %v295 = vld [vmem:[#allocation6 + $0x498] sm:$0xff]
    %v296 = vld [vmem:[#allocation6 + $0x4a0] sm:$0xff]
    %v297 = vld [vmem:[#allocation6 + $0x4a8] sm:$0xff]
    %v298 = vld [vmem:[#allocation6 + $0x4b0] sm:$0xff]
    %v299 = vld [vmem:[#allocation6 + $0x4b8] sm:$0xff]
    %v300 = vld [vmem:[#allocation6 + $0x4c0] sm:$0xff]
    %v301 = vld [vmem:[#allocation6 + $0x4c8] sm:$0xff]
    %v302 = vld [vmem:[#allocation6 + $0x4d0] sm:$0xff]
    %v303 = vld [vmem:[#allocation6 + $0x4d8] sm:$0xff]
    %v304 = vld [vmem:[#allocation6 + $0x4e0] sm:$0xff]
    %v305 = vld [vmem:[#allocation6 + $0x4e8] sm:$0xff]
    %v306 = vld [vmem:[#allocation6 + $0x4f0] sm:$0xff]
    %v307 = vld [vmem:[#allocation6 + $0x4f8] sm:$0xff]
    %v308 = vld [vmem:[#allocation6 + $0x500] sm:$0xff]
    %v309 = vld [vmem:[#allocation6 + $0x508] sm:$0xff]
    %v310 = vld [vmem:[#allocation6 + $0x510] sm:$0xff]
    %v311 = vld [vmem:[#allocation6 + $0x518] sm:$0xff]
    %v312 = vld [vmem:[#allocation6 + $0x520] sm:$0xff]
    %v313 = vld [vmem:[#allocation6 + $0x528] sm:$0xff]
    %v314 = vld [vmem:[#allocation6 + $0x530] sm:$0xff]
    %v315 = vld [vmem:[#allocation6 + $0x538] sm:$0xff]
    %v316 = vld [vmem:[#allocation6 + $0x540] sm:$0xff]
    %v317 = vld [vmem:[#allocation6 + $0x548] sm:$0xff]
    %v318 = vld [vmem:[#allocation6 + $0x550] sm:$0xff]
    %v319 = vld [vmem:[#allocation6 + $0x558] sm:$0xff]
    %v320 = vld [vmem:[#allocation6 + $0x560] sm:$0xff]
    %v321 = vld [vmem:[#allocation6 + $0x568] sm:$0xff]
    %v322 = vld [vmem:[#allocation6 + $0x570] sm:$0xff]
    %v323 = vld [vmem:[#allocation6 + $0x578] sm:$0xff]
    %v324 = vld [vmem:[#allocation6 + $0x580] sm:$0xff]
    %v325 = vld [vmem:[#allocation6 + $0x588] sm:$0xff]
    %v326 = vld [vmem:[#allocation6 + $0x590] sm:$0xff]
    %v327 = vld [vmem:[#allocation6 + $0x598] sm:$0xff]
    %v328 = vld [vmem:[#allocation6 + $0x5a0] sm:$0xff]
    %v329 = vld [vmem:[#allocation6 + $0x5a8] sm:$0xff]
    %v330 = vld [vmem:[#allocation6 + $0x5b0] sm:$0xff]
    %v331 = vld [vmem:[#allocation6 + $0x5b8] sm:$0xff]
    %v332 = vld [vmem:[#allocation6 + $0x5c0] sm:$0xff]
    %v333 = vld [vmem:[#allocation6 + $0x5c8] sm:$0xff]
    %v334 = vld [vmem:[#allocation6 + $0x5d0] sm:$0xff]
    %v335 = vld [vmem:[#allocation6 + $0x5d8] sm:$0xff]
    %v336 = vld [vmem:[#allocation6 + $0x5e0] sm:$0xff]
    %v337 = vld [vmem:[#allocation6 + $0x5e8] sm:$0xff]
    %v338 = vld [vmem:[#allocation6 + $0x5f0] sm:$0xff]
    %v339 = vld [vmem:[#allocation6 + $0x5f8] sm:$0xff]
    %v340 = vld [vmem:[#allocation6 + $0x600] sm:$0xff]
    %v341 = vld [vmem:[#allocation6 + $0x608] sm:$0xff]
    %v342 = vld [vmem:[#allocation6 + $0x610] sm:$0xff]
    %v343 = vld [vmem:[#allocation6 + $0x618] sm:$0xff]
    %v344 = vld [vmem:[#allocation6 + $0x620] sm:$0xff]
    %v345 = vld [vmem:[#allocation6 + $0x628] sm:$0xff]
    %v346 = vld [vmem:[#allocation6 + $0x630] sm:$0xff]
    %v347 = vld [vmem:[#allocation6 + $0x638] sm:$0xff]
    %v348 = vld [vmem:[#allocation6 + $0x640] sm:$0xff]
    %v349 = vld [vmem:[#allocation6 + $0x648] sm:$0xff]
    %v350 = vld [vmem:[#allocation6 + $0x650] sm:$0xff]
    %v351 = vld [vmem:[#allocation6 + $0x658] sm:$0xff]
    %v352 = vld [vmem:[#allocation6 + $0x660] sm:$0xff]
    %v353 = vld [vmem:[#allocation6 + $0x668] sm:$0xff]
    %v354 = vld [vmem:[#allocation6 + $0x670] sm:$0xff]
    %v355 = vld [vmem:[#allocation6 + $0x678] sm:$0xff]
    %v356 = vld [vmem:[#allocation6 + $0x680] sm:$0xff]
    %v357 = vld [vmem:[#allocation6 + $0x688] sm:$0xff]
    %v358 = vld [vmem:[#allocation6 + $0x690] sm:$0xff]
    %v359 = vld [vmem:[#allocation6 + $0x698] sm:$0xff]
    %v360 = vld [vmem:[#allocation6 + $0x6a0] sm:$0xff]
    %v361 = vld [vmem:[#allocation6 + $0x6a8] sm:$0xff]
    %v362 = vld [vmem:[#allocation6 + $0x6b0] sm:$0xff]
    %v363 = vld [vmem:[#allocation6 + $0x6b8] sm:$0xff]
    %v364 = vld [vmem:[#allocation6 + $0x6c0] sm:$0xff]
    %v365 = vld [vmem:[#allocation6 + $0x6c8] sm:$0xff]
    %v366 = vld [vmem:[#allocation6 + $0x6d0] sm:$0xff]
    %v367 = vld [vmem:[#allocation6 + $0x6d8] sm:$0xff]
    %v368 = vld [vmem:[#allocation6 + $0x6e0] sm:$0xff]
    %v369 = vld [vmem:[#allocation6 + $0x6e8] sm:$0xff]
    %v370 = vld [vmem:[#allocation6 + $0x6f0] sm:$0xff]
    %v371 = vld [vmem:[#allocation6 + $0x6f8] sm:$0xff]
    %v372 = vld [vmem:[#allocation6 + $0x700] sm:$0xff]
    %v373 = vld [vmem:[#allocation6 + $0x708] sm:$0xff]
    %v374 = vld [vmem:[#allocation6 + $0x710] sm:$0xff]
    %v375 = vld [vmem:[#allocation6 + $0x718] sm:$0xff]
    %v376 = vld [vmem:[#allocation6 + $0x720] sm:$0xff]
    %v377 = vld [vmem:[#allocation6 + $0x728] sm:$0xff]
    %v378 = vld [vmem:[#allocation6 + $0x730] sm:$0xff]
    %v379 = vld [vmem:[#allocation6 + $0x738] sm:$0xff]
    %v380 = vld [vmem:[#allocation6 + $0x740] sm:$0xff]
    %v381 = vld [vmem:[#allocation6 + $0x748] sm:$0xff]
    %v382 = vld [vmem:[#allocation6 + $0x750] sm:$0xff]
    %v383 = vld [vmem:[#allocation6 + $0x758] sm:$0xff]
    %v384 = vld [vmem:[#allocation6 + $0x760] sm:$0xff]
    %v385 = vld [vmem:[#allocation6 + $0x768] sm:$0xff]
    %v386 = vld [vmem:[#allocation6 + $0x770] sm:$0xff]
    %v387 = vld [vmem:[#allocation6 + $0x778] sm:$0xff]
    %v388 = vld [vmem:[#allocation6 + $0x780] sm:$0xff]
    %v389 = vld [vmem:[#allocation6 + $0x788] sm:$0xff]
    %v390 = vld [vmem:[#allocation6 + $0x790] sm:$0xff]
    %v391 = vld [vmem:[#allocation6 + $0x798] sm:$0xff]
    %v392 = vld [vmem:[#allocation6 + $0x7a0] sm:$0xff]
    %v393 = vld [vmem:[#allocation6 + $0x7a8] sm:$0xff]
    %v394 = vld [vmem:[#allocation6 + $0x7b0] sm:$0xff]
    %v395 = vld [vmem:[#allocation6 + $0x7b8] sm:$0xff]
    %v396 = vld [vmem:[#allocation6 + $0x7c0] sm:$0xff]
    %v397 = vld [vmem:[#allocation6 + $0x7c8] sm:$0xff]
    %v398 = vld [vmem:[#allocation6 + $0x7d0] sm:$0xff]
    %v399 = vld [vmem:[#allocation6 + $0x7d8] sm:$0xff]
    %v400 = vld [vmem:[#allocation6 + $0x7e0] sm:$0xff]
    %v401 = vld [vmem:[#allocation6 + $0x7e8] sm:$0xff]
    %v402 = vld [vmem:[#allocation6 + $0x7f0] sm:$0xff]
    %v403 = vld [vmem:[#allocation6 + $0x7f8] sm:$0xff]
    %v404 = vld [vmem:[#allocation6 + $0x800] sm:$0xff]
    %v405 = vld [vmem:[#allocation6 + $0x808] sm:$0xff]
    %v406 = vld [vmem:[#allocation6 + $0x810] sm:$0xff]
    %v407 = vld [vmem:[#allocation6 + $0x818] sm:$0xff]
    %v408 = vld [vmem:[#allocation6 + $0x820] sm:$0xff]
    %v409 = vld [vmem:[#allocation6 + $0x828] sm:$0xff]
    %v410 = vld [vmem:[#allocation6 + $0x830] sm:$0xff]
    %v411 = vld [vmem:[#allocation6 + $0x838] sm:$0xff]
    %v412 = vld [vmem:[#allocation6 + $0x840] sm:$0xff]
    %v413 = vld [vmem:[#allocation6 + $0x848] sm:$0xff]
    %v414 = vld [vmem:[#allocation6 + $0x850] sm:$0xff]
    %v415 = vld [vmem:[#allocation6 + $0x858] sm:$0xff]
    %v416 = vld [vmem:[#allocation6 + $0x860] sm:$0xff]
    %v417 = vld [vmem:[#allocation6 + $0x868] sm:$0xff]
    %v418 = vld [vmem:[#allocation6 + $0x870] sm:$0xff]
    %v419 = vld [vmem:[#allocation6 + $0x878] sm:$0xff]
    %v420 = vld [vmem:[#allocation6 + $0x880] sm:$0xff]
    %v421 = vld [vmem:[#allocation6 + $0x888] sm:$0xff]
    %v422 = vld [vmem:[#allocation6 + $0x890] sm:$0xff]
    %v423 = vld [vmem:[#allocation6 + $0x898] sm:$0xff]
    %v424 = vld [vmem:[#allocation6 + $0x8a0] sm:$0xff]
    %v425 = vld [vmem:[#allocation6 + $0x8a8] sm:$0xff]
    %v426 = vld [vmem:[#allocation6 + $0x8b0] sm:$0xff]
    %v427 = vld [vmem:[#allocation6 + $0x8b8] sm:$0xff]
    %v428 = vld [vmem:[#allocation6 + $0x8c0] sm:$0xff]
    %v429 = vld [vmem:[#allocation6 + $0x8c8] sm:$0xff]
    %v430 = vld [vmem:[#allocation6 + $0x8d0] sm:$0xff]
    %v431 = vld [vmem:[#allocation6 + $0x8d8] sm:$0xff]
    %v432 = vld [vmem:[#allocation6 + $0x8e0] sm:$0xff]
    %v433 = vld [vmem:[#allocation6 + $0x8e8] sm:$0xff]
    %v434 = vld [vmem:[#allocation6 + $0x8f0] sm:$0xff]
    %v435 = vld [vmem:[#allocation6 + $0x8f8] sm:$0xff]
    %v436 = vld [vmem:[#allocation6 + $0x900] sm:$0xff]
    %v437 = vld [vmem:[#allocation6 + $0x908] sm:$0xff]
    %v438 = vld [vmem:[#allocation6 + $0x910] sm:$0xff]
    %v439 = vld [vmem:[#allocation6 + $0x918] sm:$0xff]
    %v440 = vld [vmem:[#allocation6 + $0x920] sm:$0xff]
    %v441 = vld [vmem:[#allocation6 + $0x928] sm:$0xff]
    %v442 = vld [vmem:[#allocation6 + $0x930] sm:$0xff]
    %v443 = vld [vmem:[#allocation6 + $0x938] sm:$0xff]
    %v444 = vld [vmem:[#allocation6 + $0x940] sm:$0xff]
    %v445 = vld [vmem:[#allocation6 + $0x948] sm:$0xff]
    %v446 = vld [vmem:[#allocation6 + $0x950] sm:$0xff]
    %v447 = vld [vmem:[#allocation6 + $0x958] sm:$0xff]
    %v448 = vld [vmem:[#allocation6 + $0x960] sm:$0xff]
    %v449 = vld [vmem:[#allocation6 + $0x968] sm:$0xff]
    %v450 = vld [vmem:[#allocation6 + $0x970] sm:$0xff]
    %v451 = vld [vmem:[#allocation6 + $0x978] sm:$0xff]
    %v452 = vld [vmem:[#allocation6 + $0x980] sm:$0xff]
    %v453 = vld [vmem:[#allocation6 + $0x988] sm:$0xff]
    %v454 = vld [vmem:[#allocation6 + $0x990] sm:$0xff]
    %v455 = vld [vmem:[#allocation6 + $0x998] sm:$0xff]
    %v456 = vld [vmem:[#allocation6 + $0x9a0] sm:$0xff]
    %v457 = vld [vmem:[#allocation6 + $0x9a8] sm:$0xff]
    %v458 = vld [vmem:[#allocation6 + $0x9b0] sm:$0xff]
    %v459 = vld [vmem:[#allocation6 + $0x9b8] sm:$0xff]
    %v460 = vld [vmem:[#allocation6 + $0x9c0] sm:$0xff]
    %v461 = vld [vmem:[#allocation6 + $0x9c8] sm:$0xff]
    %v462 = vld [vmem:[#allocation6 + $0x9d0] sm:$0xff]
    %v463 = vld [vmem:[#allocation6 + $0x9d8] sm:$0xff]
    %v464 = vld [vmem:[#allocation6 + $0x9e0] sm:$0xff]
    %v465 = vld [vmem:[#allocation6 + $0x9e8] sm:$0xff]
    %v466 = vld [vmem:[#allocation6 + $0x9f0] sm:$0xff]
    %v467 = vld [vmem:[#allocation6 + $0x9f8] sm:$0xff]
    %v468 = vld [vmem:[#allocation6 + $0xa00] sm:$0xff]
    %v469 = vld [vmem:[#allocation6 + $0xa08] sm:$0xff]
    %v470 = vld [vmem:[#allocation6 + $0xa10] sm:$0xff]
    %v471 = vld [vmem:[#allocation6 + $0xa18] sm:$0xff]
    %v472 = vld [vmem:[#allocation6 + $0xa20] sm:$0xff]
    %v473 = vld [vmem:[#allocation6 + $0xa28] sm:$0xff]
    %v474 = vld [vmem:[#allocation6 + $0xa30] sm:$0xff]
    %v475 = vld [vmem:[#allocation6 + $0xa38] sm:$0xff]
    %v476 = vld [vmem:[#allocation6 + $0xa40] sm:$0xff]
    %v477 = vld [vmem:[#allocation6 + $0xa48] sm:$0xff]
    %v478 = vld [vmem:[#allocation6 + $0xa50] sm:$0xff]
    %v479 = vld [vmem:[#allocation6 + $0xa58] sm:$0xff]
    %v480 = vld [vmem:[#allocation6 + $0xa60] sm:$0xff]
    %v481 = vld [vmem:[#allocation6 + $0xa68] sm:$0xff]
    %v482 = vld [vmem:[#allocation6 + $0xa70] sm:$0xff]
    %v483 = vld [vmem:[#allocation6 + $0xa78] sm:$0xff]
    %v484 = vld [vmem:[#allocation6 + $0xa80] sm:$0xff]
    %v485 = vld [vmem:[#allocation6 + $0xa88] sm:$0xff]
    %v486 = vld [vmem:[#allocation6 + $0xa90] sm:$0xff]
    %v487 = vld [vmem:[#allocation6 + $0xa98] sm:$0xff]
    %v488 = vld [vmem:[#allocation6 + $0xaa0] sm:$0xff]
    %v489 = vld [vmem:[#allocation6 + $0xaa8] sm:$0xff]
    %v490 = vld [vmem:[#allocation6 + $0xab0] sm:$0xff]
    %v491 = vld [vmem:[#allocation6 + $0xab8] sm:$0xff]
    %v492 = vld [vmem:[#allocation6 + $0xac0] sm:$0xff]
    %v493 = vld [vmem:[#allocation6 + $0xac8] sm:$0xff]
    %v494 = vld [vmem:[#allocation6 + $0xad0] sm:$0xff]
    %v495 = vld [vmem:[#allocation6 + $0xad8] sm:$0xff]
    %v496 = vld [vmem:[#allocation6 + $0xae0] sm:$0xff]
    %v497 = vld [vmem:[#allocation6 + $0xae8] sm:$0xff]
    %v498 = vld [vmem:[#allocation6 + $0xaf0] sm:$0xff]
    %v499 = vld [vmem:[#allocation6 + $0xaf8] sm:$0xff]
    %v500 = vld [vmem:[#allocation6 + $0xb00] sm:$0xff]
    %v501 = vld [vmem:[#allocation6 + $0xb08] sm:$0xff]
    %v502 = vld [vmem:[#allocation6 + $0xb10] sm:$0xff]
    %v503 = vld [vmem:[#allocation6 + $0xb18] sm:$0xff]
    %v504 = vld [vmem:[#allocation6 + $0xb20] sm:$0xff]
    %v505 = vld [vmem:[#allocation6 + $0xb28] sm:$0xff]
    %v506 = vld [vmem:[#allocation6 + $0xb30] sm:$0xff]
    %v507 = vld [vmem:[#allocation6 + $0xb38] sm:$0xff]
    %v508 = vld [vmem:[#allocation6 + $0xb40] sm:$0xff]
    %v509 = vld [vmem:[#allocation6 + $0xb48] sm:$0xff]
    %v510 = vld [vmem:[#allocation6 + $0xb50] sm:$0xff]
    %v511 = vld [vmem:[#allocation6 + $0xb58] sm:$0xff]
    %v512 = vld [vmem:[#allocation6 + $0xb60] sm:$0xff]
    %v513 = vld [vmem:[#allocation6 + $0xb68] sm:$0xff]
    %v514 = vld [vmem:[#allocation6 + $0xb70] sm:$0xff]
    %v515 = vld [vmem:[#allocation6 + $0xb78] sm:$0xff]
    %v516 = vld [vmem:[#allocation6 + $0xb80] sm:$0xff]
    %v517 = vld [vmem:[#allocation6 + $0xb88] sm:$0xff]
    %v518 = vld [vmem:[#allocation6 + $0xb90] sm:$0xff]
    %v519 = vld [vmem:[#allocation6 + $0xb98] sm:$0xff]
    %v520 = vld [vmem:[#allocation6 + $0xba0] sm:$0xff]
    %v521 = vld [vmem:[#allocation6 + $0xba8] sm:$0xff]
    %v522 = vld [vmem:[#allocation6 + $0xbb0] sm:$0xff]
    %v523 = vld [vmem:[#allocation6 + $0xbb8] sm:$0xff]
    %v524 = vld [vmem:[#allocation6 + $0xbc0] sm:$0xff]
    %v525 = vld [vmem:[#allocation6 + $0xbc8] sm:$0xff]
    %v526 = vld [vmem:[#allocation6 + $0xbd0] sm:$0xff]
    %v527 = vld [vmem:[#allocation6 + $0xbd8] sm:$0xff]
    %v528 = vld [vmem:[#allocation6 + $0xbe0] sm:$0xff]
    %v529 = vld [vmem:[#allocation6 + $0xbe8] sm:$0xff]
    %v530 = vld [vmem:[#allocation6 + $0xbf0] sm:$0xff]
    %v531 = vld [vmem:[#allocation6 + $0xbf8] sm:$0xff]
    %v532 = vld [vmem:[#allocation6 + $0xc00] sm:$0xff]
    %v533 = vld [vmem:[#allocation6 + $0xc08] sm:$0xff]
    %v534 = vld [vmem:[#allocation6 + $0xc10] sm:$0xff]
    %v535 = vld [vmem:[#allocation6 + $0xc18] sm:$0xff]
    %v536 = vld [vmem:[#allocation6 + $0xc20] sm:$0xff]
    %v537 = vld [vmem:[#allocation6 + $0xc28] sm:$0xff]
    %v538 = vld [vmem:[#allocation6 + $0xc30] sm:$0xff]
    %v539 = vld [vmem:[#allocation6 + $0xc38] sm:$0xff]
    %v540 = vld [vmem:[#allocation6 + $0xc40] sm:$0xff]
    %v541 = vld [vmem:[#allocation6 + $0xc48] sm:$0xff]
    %v542 = vld [vmem:[#allocation6 + $0xc50] sm:$0xff]
    %v543 = vld [vmem:[#allocation6 + $0xc58] sm:$0xff]
    %v544 = vld [vmem:[#allocation6 + $0xc60] sm:$0xff]
    %v545 = vld [vmem:[#allocation6 + $0xc68] sm:$0xff]
    %v546 = vld [vmem:[#allocation6 + $0xc70] sm:$0xff]
    %v547 = vld [vmem:[#allocation6 + $0xc78] sm:$0xff]
    %v548 = vld [vmem:[#allocation6 + $0xc80] sm:$0xff]
    %v549 = vld [vmem:[#allocation6 + $0xc88] sm:$0xff]
    %v550 = vld [vmem:[#allocation6 + $0xc90] sm:$0xff]
    %v551 = vld [vmem:[#allocation6 + $0xc98] sm:$0xff]
    %v552 = vld [vmem:[#allocation6 + $0xca0] sm:$0xff]
    %v553 = vld [vmem:[#allocation6 + $0xca8] sm:$0xff]
    %v554 = vld [vmem:[#allocation6 + $0xcb0] sm:$0xff]
    %v555 = vld [vmem:[#allocation6 + $0xcb8] sm:$0xff]
    %v556 = vld [vmem:[#allocation6 + $0xcc0] sm:$0xff]
    %v557 = vld [vmem:[#allocation6 + $0xcc8] sm:$0xff]
    %v558 = vld [vmem:[#allocation6 + $0xcd0] sm:$0xff]
    %v559 = vld [vmem:[#allocation6 + $0xcd8] sm:$0xff]
    %v560 = vld [vmem:[#allocation6 + $0xce0] sm:$0xff]
    %v561 = vld [vmem:[#allocation6 + $0xce8] sm:$0xff]
    %v562 = vld [vmem:[#allocation6 + $0xcf0] sm:$0xff]
    %v563 = vld [vmem:[#allocation6 + $0xcf8] sm:$0xff]
    %v564 = vld [vmem:[#allocation6 + $0xd00] sm:$0xff]
    %v565 = vld [vmem:[#allocation6 + $0xd08] sm:$0xff]
    %v566 = vld [vmem:[#allocation6 + $0xd10] sm:$0xff]
    %v567 = vld [vmem:[#allocation6 + $0xd18] sm:$0xff]
    %v568 = vld [vmem:[#allocation6 + $0xd20] sm:$0xff]
    %v569 = vld [vmem:[#allocation6 + $0xd28] sm:$0xff]
    %v570 = vld [vmem:[#allocation6 + $0xd30] sm:$0xff]
    %v571 = vld [vmem:[#allocation6 + $0xd38] sm:$0xff]
    %v572 = vld [vmem:[#allocation6 + $0xd40] sm:$0xff]
    %v573 = vld [vmem:[#allocation6 + $0xd48] sm:$0xff]
    %v574 = vld [vmem:[#allocation6 + $0xd50] sm:$0xff]
    %v575 = vld [vmem:[#allocation6 + $0xd58] sm:$0xff]
    %v576 = vld [vmem:[#allocation6 + $0xd60] sm:$0xff]
    %v577 = vld [vmem:[#allocation6 + $0xd68] sm:$0xff]
    %v578 = vld [vmem:[#allocation6 + $0xd70] sm:$0xff]
    %v579 = vld [vmem:[#allocation6 + $0xd78] sm:$0xff]
    %v580 = vld [vmem:[#allocation6 + $0xd80] sm:$0xff]
    %v581 = vld [vmem:[#allocation6 + $0xd88] sm:$0xff]
    %v582 = vld [vmem:[#allocation6 + $0xd90] sm:$0xff]
    %v583 = vld [vmem:[#allocation6 + $0xd98] sm:$0xff]
    %v584 = vld [vmem:[#allocation6 + $0xda0] sm:$0xff]
    %v585 = vld [vmem:[#allocation6 + $0xda8] sm:$0xff]
    %v586 = vld [vmem:[#allocation6 + $0xdb0] sm:$0xff]
    %v587 = vld [vmem:[#allocation6 + $0xdb8] sm:$0xff]
    %v588 = vld [vmem:[#allocation6 + $0xdc0] sm:$0xff]
    %v589 = vld [vmem:[#allocation6 + $0xdc8] sm:$0xff]
    %v590 = vld [vmem:[#allocation6 + $0xdd0] sm:$0xff]
    %v591 = vld [vmem:[#allocation6 + $0xdd8] sm:$0xff]
    %v592 = vld [vmem:[#allocation6 + $0xde0] sm:$0xff]
    %v593 = vld [vmem:[#allocation6 + $0xde8] sm:$0xff]
    %v594 = vld [vmem:[#allocation6 + $0xdf0] sm:$0xff]
    %v595 = vld [vmem:[#allocation6 + $0xdf8] sm:$0xff]
    %v596 = vld [vmem:[#allocation6 + $0xe00] sm:$0xff]
    %v597 = vld [vmem:[#allocation6 + $0xe08] sm:$0xff]
    %v598 = vld [vmem:[#allocation6 + $0xe10] sm:$0xff]
    %v599 = vld [vmem:[#allocation6 + $0xe18] sm:$0xff]
    %v600 = vld [vmem:[#allocation6 + $0xe20] sm:$0xff]
    %v601 = vld [vmem:[#allocation6 + $0xe28] sm:$0xff]
    %v602 = vld [vmem:[#allocation6 + $0xe30] sm:$0xff]
    %v603 = vld [vmem:[#allocation6 + $0xe38] sm:$0xff]
    %v604 = vld [vmem:[#allocation6 + $0xe40] sm:$0xff]
    %v605 = vld [vmem:[#allocation6 + $0xe48] sm:$0xff]
    %v606 = vld [vmem:[#allocation6 + $0xe50] sm:$0xff]
    %v607 = vld [vmem:[#allocation6 + $0xe58] sm:$0xff]
    %v608 = vld [vmem:[#allocation6 + $0xe60] sm:$0xff]
    %v609 = vld [vmem:[#allocation6 + $0xe68] sm:$0xff]
    %v610 = vld [vmem:[#allocation6 + $0xe70] sm:$0xff]
    %v611 = vld [vmem:[#allocation6 + $0xe78] sm:$0xff]
    %v612 = vld [vmem:[#allocation6 + $0xe80] sm:$0xff]
    %v613 = vld [vmem:[#allocation6 + $0xe88] sm:$0xff]
    %v614 = vld [vmem:[#allocation6 + $0xe90] sm:$0xff]
    %v615 = vld [vmem:[#allocation6 + $0xe98] sm:$0xff]
    %v616 = vld [vmem:[#allocation6 + $0xea0] sm:$0xff]
    %v617 = vld [vmem:[#allocation6 + $0xea8] sm:$0xff]
    %v618 = vld [vmem:[#allocation6 + $0xeb0] sm:$0xff]
    %v619 = vld [vmem:[#allocation6 + $0xeb8] sm:$0xff]
    %v620 = vld [vmem:[#allocation6 + $0xec0] sm:$0xff]
    %v621 = vld [vmem:[#allocation6 + $0xec8] sm:$0xff]
    %v622 = vld [vmem:[#allocation6 + $0xed0] sm:$0xff]
    %v623 = vld [vmem:[#allocation6 + $0xed8] sm:$0xff]
    %v624 = vld [vmem:[#allocation6 + $0xee0] sm:$0xff]
    %v625 = vld [vmem:[#allocation6 + $0xee8] sm:$0xff]
    %v626 = vld [vmem:[#allocation6 + $0xef0] sm:$0xff]
    %v627 = vld [vmem:[#allocation6 + $0xef8] sm:$0xff]
    %v628 = vld [vmem:[#allocation6 + $0xf00] sm:$0xff]
    %v629 = vld [vmem:[#allocation6 + $0xf08] sm:$0xff]
    %v630 = vld [vmem:[#allocation6 + $0xf10] sm:$0xff]
    %v631 = vld [vmem:[#allocation6 + $0xf18] sm:$0xff]
    %v632 = vld [vmem:[#allocation6 + $0xf20] sm:$0xff]
    %v633 = vld [vmem:[#allocation6 + $0xf28] sm:$0xff]
    %v634 = vld [vmem:[#allocation6 + $0xf30] sm:$0xff]
    %v635 = vld [vmem:[#allocation6 + $0xf38] sm:$0xff]
    %v636 = vld [vmem:[#allocation6 + $0xf40] sm:$0xff]
    %v637 = vld [vmem:[#allocation6 + $0xf48] sm:$0xff]
    %v638 = vld [vmem:[#allocation6 + $0xf50] sm:$0xff]
    %v639 = vld [vmem:[#allocation6 + $0xf58] sm:$0xff]
    %v640 = vld [vmem:[#allocation6 + $0xf60] sm:$0xff]
    %v641 = vld [vmem:[#allocation6 + $0xf68] sm:$0xff]
    %v642 = vld [vmem:[#allocation6 + $0xf70] sm:$0xff]
    %v643 = vld [vmem:[#allocation6 + $0xf78] sm:$0xff]
    %v644 = vld [vmem:[#allocation6 + $0xf80] sm:$0xff]
    %v645 = vld [vmem:[#allocation6 + $0xf88] sm:$0xff]
    %v646 = vld [vmem:[#allocation6 + $0xf90] sm:$0xff]
    %v647 = vld [vmem:[#allocation6 + $0xf98] sm:$0xff]
    %v648 = vld [vmem:[#allocation6 + $0xfa0] sm:$0xff]
    %v649 = vld [vmem:[#allocation6 + $0xfa8] sm:$0xff]
    %v650 = vld [vmem:[#allocation6 + $0xfb0] sm:$0xff]
    %v651 = vld [vmem:[#allocation6 + $0xfb8] sm:$0xff]
    %v652 = vld [vmem:[#allocation6 + $0xfc0] sm:$0xff]
    %v653 = vld [vmem:[#allocation6 + $0xfc8] sm:$0xff]
    %v654 = vld [vmem:[#allocation6 + $0xfd0] sm:$0xff]
    %v655 = vld [vmem:[#allocation6 + $0xfd8] sm:$0xff]
    %v656 = vld [vmem:[#allocation6 + $0xfe0] sm:$0xff]
    %v657 = vld [vmem:[#allocation6 + $0xfe8] sm:$0xff]
    %v658 = vld [vmem:[#allocation6 + $0xff0] sm:$0xff]
    %v659 = vld [vmem:[#allocation6 + $0xff8] sm:$0xff]
    %v660 = vld [vmem:[#allocation6 + $0x1000] sm:$0xff]
    %v661 = vld [vmem:[#allocation6 + $0x1008] sm:$0xff]
    %v662 = vld [vmem:[#allocation6 + $0x1010] sm:$0xff]
    %v663 = vld [vmem:[#allocation6 + $0x1018] sm:$0xff]
    %v664 = vld [vmem:[#allocation6 + $0x1020] sm:$0xff]
    %v665 = vld [vmem:[#allocation6 + $0x1028] sm:$0xff]
    %v666 = vld [vmem:[#allocation6 + $0x1030] sm:$0xff]
    %v667 = vld [vmem:[#allocation6 + $0x1038] sm:$0xff]
    %v668 = vld [vmem:[#allocation6 + $0x1040] sm:$0xff]
    %v669 = vld [vmem:[#allocation6 + $0x1048] sm:$0xff]
    %v670 = vld [vmem:[#allocation6 + $0x1050] sm:$0xff]
    %v671 = vld [vmem:[#allocation6 + $0x1058] sm:$0xff]
    %v672 = vld [vmem:[#allocation6 + $0x1060] sm:$0xff]
    %v673 = vld [vmem:[#allocation6 + $0x1068] sm:$0xff]
    %v674 = vld [vmem:[#allocation6 + $0x1070] sm:$0xff]
    %v675 = vld [vmem:[#allocation6 + $0x1078] sm:$0xff]
    %v676 = vld [vmem:[#allocation6 + $0x1080] sm:$0xff]
    %v677 = vld [vmem:[#allocation6 + $0x1088] sm:$0xff]
    %v678 = vld [vmem:[#allocation6 + $0x1090] sm:$0xff]
    %v679 = vld [vmem:[#allocation6 + $0x1098] sm:$0xff]
    %v680 = vld [vmem:[#allocation6 + $0x10a0] sm:$0xff]
    %v681 = vld [vmem:[#allocation6 + $0x10a8] sm:$0xff]
    %v682 = vld [vmem:[#allocation6 + $0x10b0] sm:$0xff]
    %v683 = vld [vmem:[#allocation6 + $0x10b8] sm:$0xff]
    %v684 = vld [vmem:[#allocation6 + $0x10c0] sm:$0xff]
    %v685 = vld [vmem:[#allocation6 + $0x10c8] sm:$0xff]
    %v686 = vld [vmem:[#allocation6 + $0x10d0] sm:$0xff]
    %v687 = vld [vmem:[#allocation6 + $0x10d8] sm:$0xff]
    %v688 = vld [vmem:[#allocation6 + $0x10e0] sm:$0xff]
    %v689 = vld [vmem:[#allocation6 + $0x10e8] sm:$0xff]
    %v690 = vld [vmem:[#allocation6 + $0x10f0] sm:$0xff]
    %v691 = vld [vmem:[#allocation6 + $0x10f8] sm:$0xff]
    %v692 = vld [vmem:[#allocation6 + $0x1100] sm:$0xff]
    %v693 = vld [vmem:[#allocation6 + $0x1108] sm:$0xff]
    %v694 = vld [vmem:[#allocation6 + $0x1110] sm:$0xff]
    %v695 = vld [vmem:[#allocation6 + $0x1118] sm:$0xff]
    %v696 = vld [vmem:[#allocation6 + $0x1120] sm:$0xff]
    %v697 = vld [vmem:[#allocation6 + $0x1128] sm:$0xff]
    %v698 = vld [vmem:[#allocation6 + $0x1130] sm:$0xff]
    %v699 = vld [vmem:[#allocation6 + $0x1138] sm:$0xff]
    %v700 = vld [vmem:[#allocation6 + $0x1140] sm:$0xff]
    %v701 = vld [vmem:[#allocation6 + $0x1148] sm:$0xff]
    %v702 = vld [vmem:[#allocation6 + $0x1150] sm:$0xff]
    %v703 = vld [vmem:[#allocation6 + $0x1158] sm:$0xff]
    %v704 = vld [vmem:[#allocation6 + $0x1160] sm:$0xff]
    %v705 = vld [vmem:[#allocation6 + $0x1168] sm:$0xff]
    %v706 = vld [vmem:[#allocation6 + $0x1170] sm:$0xff]
    %v707 = vld [vmem:[#allocation6 + $0x1178] sm:$0xff]
    %v708 = vld [vmem:[#allocation6 + $0x1180] sm:$0xff]
    %v709 = vld [vmem:[#allocation6 + $0x1188] sm:$0xff]
    %v710 = vld [vmem:[#allocation6 + $0x1190] sm:$0xff]
    %v711 = vld [vmem:[#allocation6 + $0x1198] sm:$0xff]
    %v712 = vld [vmem:[#allocation6 + $0x11a0] sm:$0xff]
    %v713 = vld [vmem:[#allocation6 + $0x11a8] sm:$0xff]
    %v714 = vld [vmem:[#allocation6 + $0x11b0] sm:$0xff]
    %v715 = vld [vmem:[#allocation6 + $0x11b8] sm:$0xff]
    %v716 = vld [vmem:[#allocation6 + $0x11c0] sm:$0xff]
    %v717 = vld [vmem:[#allocation6 + $0x11c8] sm:$0xff]
    %v718 = vld [vmem:[#allocation6 + $0x11d0] sm:$0xff]
    %v719 = vld [vmem:[#allocation6 + $0x11d8] sm:$0xff]
    %v720 = vld [vmem:[#allocation6 + $0x11e0] sm:$0xff]
    %v721 = vld [vmem:[#allocation6 + $0x11e8] sm:$0xff]
    %v722 = vld [vmem:[#allocation6 + $0x11f0] sm:$0xff]
    %v723 = vld [vmem:[#allocation6 + $0x11f8] sm:$0xff]
    %v724 = vld [vmem:[#allocation6 + $0x1200] sm:$0xff]
    %v725 = vld [vmem:[#allocation6 + $0x1208] sm:$0xff]
    %v726 = vld [vmem:[#allocation6 + $0x1210] sm:$0xff]
    %v727 = vld [vmem:[#allocation6 + $0x1218] sm:$0xff]
    %v728 = vld [vmem:[#allocation6 + $0x1220] sm:$0xff]
    %v729 = vld [vmem:[#allocation6 + $0x1228] sm:$0xff]
    %v730 = vld [vmem:[#allocation6 + $0x1230] sm:$0xff]
    %v731 = vld [vmem:[#allocation6 + $0x1238] sm:$0xff]
    %v732 = vld [vmem:[#allocation6 + $0x1240] sm:$0xff]
    %v733 = vld [vmem:[#allocation6 + $0x1248] sm:$0xff]
    %v734 = vld [vmem:[#allocation6 + $0x1250] sm:$0xff]
    %v735 = vld [vmem:[#allocation6 + $0x1258] sm:$0xff]
    %v736 = vld [vmem:[#allocation6 + $0x1260] sm:$0xff]
    %v737 = vld [vmem:[#allocation6 + $0x1268] sm:$0xff]
    %v738 = vld [vmem:[#allocation6 + $0x1270] sm:$0xff]
    %v739 = vld [vmem:[#allocation6 + $0x1278] sm:$0xff]
    %v740 = vld [vmem:[#allocation6 + $0x1280] sm:$0xff]
    %v741 = vld [vmem:[#allocation6 + $0x1288] sm:$0xff]
    %v742 = vld [vmem:[#allocation6 + $0x1290] sm:$0xff]
    %v743 = vld [vmem:[#allocation6 + $0x1298] sm:$0xff]
    %v744 = vld [vmem:[#allocation6 + $0x12a0] sm:$0xff]
    %v745 = vld [vmem:[#allocation6 + $0x12a8] sm:$0xff]
    %v746 = vld [vmem:[#allocation6 + $0x12b0] sm:$0xff]
    %v747 = vld [vmem:[#allocation6 + $0x12b8] sm:$0xff]
    %v748 = vld [vmem:[#allocation6 + $0x12c0] sm:$0xff]
    %v749 = vld [vmem:[#allocation6 + $0x12c8] sm:$0xff]
    %v750 = vld [vmem:[#allocation6 + $0x12d0] sm:$0xff]
    %v751 = vld [vmem:[#allocation6 + $0x12d8] sm:$0xff]
    %v752 = vld [vmem:[#allocation6 + $0x12e0] sm:$0xff]
    %v753 = vld [vmem:[#allocation6 + $0x12e8] sm:$0xff]
    %v754 = vld [vmem:[#allocation6 + $0x12f0] sm:$0xff]
    %v755 = vld [vmem:[#allocation6 + $0x12f8] sm:$0xff]
    %v756 = vld [vmem:[#allocation6 + $0x1300] sm:$0xff]
    %v757 = vld [vmem:[#allocation6 + $0x1308] sm:$0xff]
    %v758 = vld [vmem:[#allocation6 + $0x1310] sm:$0xff]
    %v759 = vld [vmem:[#allocation6 + $0x1318] sm:$0xff]
    %v760 = vld [vmem:[#allocation6 + $0x1320] sm:$0xff]
    %v761 = vld [vmem:[#allocation6 + $0x1328] sm:$0xff]
    %v762 = vld [vmem:[#allocation6 + $0x1330] sm:$0xff]
    %v763 = vld [vmem:[#allocation6 + $0x1338] sm:$0xff]
    %v764 = vld [vmem:[#allocation6 + $0x1340] sm:$0xff]
    %v765 = vld [vmem:[#allocation6 + $0x1348] sm:$0xff]
    %v766 = vld [vmem:[#allocation6 + $0x1350] sm:$0xff]
    %v767 = vld [vmem:[#allocation6 + $0x1358] sm:$0xff]
    %v768 = vld [vmem:[#allocation6 + $0x1360] sm:$0xff]
    %v769 = vld [vmem:[#allocation6 + $0x1368] sm:$0xff]
    %v770 = vld [vmem:[#allocation6 + $0x1370] sm:$0xff]
    %v771 = vld [vmem:[#allocation6 + $0x1378] sm:$0xff]
    %v772 = vld [vmem:[#allocation6 + $0x1380] sm:$0xff]
    %v773 = vld [vmem:[#allocation6 + $0x1388] sm:$0xff]
    %v774 = vld [vmem:[#allocation6 + $0x1390] sm:$0xff]
    %v775 = vld [vmem:[#allocation6 + $0x1398] sm:$0xff]
    %v776 = vld [vmem:[#allocation6 + $0x13a0] sm:$0xff]
    %v777 = vld [vmem:[#allocation6 + $0x13a8] sm:$0xff]
    %v778 = vld [vmem:[#allocation6 + $0x13b0] sm:$0xff]
    %v779 = vld [vmem:[#allocation6 + $0x13b8] sm:$0xff]
    %v780 = vld [vmem:[#allocation6 + $0x13c0] sm:$0xff]
    %v781 = vld [vmem:[#allocation6 + $0x13c8] sm:$0xff]
    %v782 = vld [vmem:[#allocation6 + $0x13d0] sm:$0xff]
    %v783 = vld [vmem:[#allocation6 + $0x13d8] sm:$0xff]
    %v784 = vld [vmem:[#allocation6 + $0x13e0] sm:$0xff]
    %v785 = vld [vmem:[#allocation6 + $0x13e8] sm:$0xff]
    %v786 = vld [vmem:[#allocation6 + $0x13f0] sm:$0xff]
    %v787 = vld [vmem:[#allocation6 + $0x13f8] sm:$0xff]
    %v788 = vld [vmem:[#allocation6 + $0x1400] sm:$0xff]
    %v789 = vld [vmem:[#allocation6 + $0x1408] sm:$0xff]
    %v790 = vld [vmem:[#allocation6 + $0x1410] sm:$0xff]
    %v791 = vld [vmem:[#allocation6 + $0x1418] sm:$0xff]
    %v792 = vld [vmem:[#allocation6 + $0x1420] sm:$0xff]
    %v793 = vld [vmem:[#allocation6 + $0x1428] sm:$0xff]
    %v794 = vld [vmem:[#allocation6 + $0x1430] sm:$0xff]
    %v795 = vld [vmem:[#allocation6 + $0x1438] sm:$0xff]
    %v796 = vld [vmem:[#allocation6 + $0x1440] sm:$0xff]
    %v797 = vld [vmem:[#allocation6 + $0x1448] sm:$0xff]
    %v798 = vld [vmem:[#allocation6 + $0x1450] sm:$0xff]
    %v799 = vld [vmem:[#allocation6 + $0x1458] sm:$0xff]
    %v800 = vld [vmem:[#allocation6 + $0x1460] sm:$0xff]
    %v801 = vld [vmem:[#allocation6 + $0x1468] sm:$0xff]
    %v802 = vld [vmem:[#allocation6 + $0x1470] sm:$0xff]
    %v803 = vld [vmem:[#allocation6 + $0x1478] sm:$0xff]
    %v804 = vld [vmem:[#allocation6 + $0x1480] sm:$0xff]
    %v805 = vld [vmem:[#allocation6 + $0x1488] sm:$0xff]
    %v806 = vld [vmem:[#allocation6 + $0x1490] sm:$0xff]
    %v807 = vld [vmem:[#allocation6 + $0x1498] sm:$0xff]
    %v808 = vld [vmem:[#allocation6 + $0x14a0] sm:$0xff]
    %v809 = vld [vmem:[#allocation6 + $0x14a8] sm:$0xff]
    %v810 = vld [vmem:[#allocation6 + $0x14b0] sm:$0xff]
    %v811 = vld [vmem:[#allocation6 + $0x14b8] sm:$0xff]
    %v812 = vld [vmem:[#allocation6 + $0x14c0] sm:$0xff]
    %v813 = vld [vmem:[#allocation6 + $0x14c8] sm:$0xff]
    %v814 = vld [vmem:[#allocation6 + $0x14d0] sm:$0xff]
    %v815 = vld [vmem:[#allocation6 + $0x14d8] sm:$0xff]
    %v816 = vld [vmem:[#allocation6 + $0x14e0] sm:$0xff]
    %v817 = vld [vmem:[#allocation6 + $0x14e8] sm:$0xff]
    %v818 = vld [vmem:[#allocation6 + $0x14f0] sm:$0xff]
    %v819 = vld [vmem:[#allocation6 + $0x14f8] sm:$0xff]
    %v820 = vld [vmem:[#allocation6 + $0x1500] sm:$0xff]
    %v821 = vld [vmem:[#allocation6 + $0x1508] sm:$0xff]
    %v822 = vld [vmem:[#allocation6 + $0x1510] sm:$0xff]
    %v823 = vld [vmem:[#allocation6 + $0x1518] sm:$0xff]
    %v824 = vld [vmem:[#allocation6 + $0x1520] sm:$0xff]
    %v825 = vld [vmem:[#allocation6 + $0x1528] sm:$0xff]
    %v826 = vld [vmem:[#allocation6 + $0x1530] sm:$0xff]
    %v827 = vld [vmem:[#allocation6 + $0x1538] sm:$0xff]
    %v828 = vld [vmem:[#allocation6 + $0x1540] sm:$0xff]
    %v829 = vld [vmem:[#allocation6 + $0x1548] sm:$0xff]
    %v830 = vld [vmem:[#allocation6 + $0x1550] sm:$0xff]
    %v831 = vld [vmem:[#allocation6 + $0x1558] sm:$0xff]
    %v832 = vld [vmem:[#allocation6 + $0x1560] sm:$0xff]
    %v833 = vld [vmem:[#allocation6 + $0x1568] sm:$0xff]
    %v834 = vld [vmem:[#allocation6 + $0x1570] sm:$0xff]
    %v835 = vld [vmem:[#allocation6 + $0x1578] sm:$0xff]
    %v836 = vld [vmem:[#allocation6 + $0x1580] sm:$0xff]
    %v837 = vld [vmem:[#allocation6 + $0x1588] sm:$0xff]
    %v838 = vld [vmem:[#allocation6 + $0x1590] sm:$0xff]
    %v839 = vld [vmem:[#allocation6 + $0x1598] sm:$0xff]
    %v840 = vld [vmem:[#allocation6 + $0x15a0] sm:$0xff]
    %v841 = vld [vmem:[#allocation6 + $0x15a8] sm:$0xff]
    %v842 = vld [vmem:[#allocation6 + $0x15b0] sm:$0xff]
    %v843 = vld [vmem:[#allocation6 + $0x15b8] sm:$0xff]
    %v844 = vld [vmem:[#allocation6 + $0x15c0] sm:$0xff]
    %v845 = vld [vmem:[#allocation6 + $0x15c8] sm:$0xff]
    %v846 = vld [vmem:[#allocation6 + $0x15d0] sm:$0xff]
    %v847 = vld [vmem:[#allocation6 + $0x15d8] sm:$0xff]
    %v848 = vld [vmem:[#allocation6 + $0x15e0] sm:$0xff]
    %v849 = vld [vmem:[#allocation6 + $0x15e8] sm:$0xff]
    %v850 = vld [vmem:[#allocation6 + $0x15f0] sm:$0xff]
    %v851 = vld [vmem:[#allocation6 + $0x15f8] sm:$0xff]
    %v852 = vld [vmem:[#allocation6 + $0x1600] sm:$0xff]
    %v853 = vld [vmem:[#allocation6 + $0x1608] sm:$0xff]
    %v854 = vld [vmem:[#allocation6 + $0x1610] sm:$0xff]
    %v855 = vld [vmem:[#allocation6 + $0x1618] sm:$0xff]
    %v856 = vld [vmem:[#allocation6 + $0x1620] sm:$0xff]
    %v857 = vld [vmem:[#allocation6 + $0x1628] sm:$0xff]
    %v858 = vld [vmem:[#allocation6 + $0x1630] sm:$0xff]
    %v859 = vld [vmem:[#allocation6 + $0x1638] sm:$0xff]
    %v860 = vld [vmem:[#allocation6 + $0x1640] sm:$0xff]
    %v861 = vld [vmem:[#allocation6 + $0x1648] sm:$0xff]
    %v862 = vld [vmem:[#allocation6 + $0x1650] sm:$0xff]
    %v863 = vld [vmem:[#allocation6 + $0x1658] sm:$0xff]
    %v864 = vld [vmem:[#allocation6 + $0x1660] sm:$0xff]
    %v865 = vld [vmem:[#allocation6 + $0x1668] sm:$0xff]
    %v866 = vld [vmem:[#allocation6 + $0x1670] sm:$0xff]
    %v867 = vld [vmem:[#allocation6 + $0x1678] sm:$0xff]
    %v868 = vld [vmem:[#allocation6 + $0x1680] sm:$0xff]
    %v869 = vld [vmem:[#allocation6 + $0x1688] sm:$0xff]
    %v870 = vld [vmem:[#allocation6 + $0x1690] sm:$0xff]
    %v871 = vld [vmem:[#allocation6 + $0x1698] sm:$0xff]
    %v872 = vld [vmem:[#allocation6 + $0x16a0] sm:$0xff]
    %v873 = vld [vmem:[#allocation6 + $0x16a8] sm:$0xff]
    %v874 = vld [vmem:[#allocation6 + $0x16b0] sm:$0xff]
    %v875 = vld [vmem:[#allocation6 + $0x16b8] sm:$0xff]
    %v876 = vld [vmem:[#allocation6 + $0x16c0] sm:$0xff]
    %v877 = vld [vmem:[#allocation6 + $0x16c8] sm:$0xff]
    %v878 = vld [vmem:[#allocation6 + $0x16d0] sm:$0xff]
    %v879 = vld [vmem:[#allocation6 + $0x16d8] sm:$0xff]
    %v880 = vld [vmem:[#allocation6 + $0x16e0] sm:$0xff]
    %v881 = vld [vmem:[#allocation6 + $0x16e8] sm:$0xff]
    %v882 = vld [vmem:[#allocation6 + $0x16f0] sm:$0xff]
    %v883 = vld [vmem:[#allocation6 + $0x16f8] sm:$0xff]
    %v884 = vld [vmem:[#allocation6 + $0x1700] sm:$0xff]
    %v885 = vld [vmem:[#allocation6 + $0x1708] sm:$0xff]
    %v886 = vld [vmem:[#allocation6 + $0x1710] sm:$0xff]
    %v887 = vld [vmem:[#allocation6 + $0x1718] sm:$0xff]
    %v888 = vld [vmem:[#allocation6 + $0x1720] sm:$0xff]
    %v889 = vld [vmem:[#allocation6 + $0x1728] sm:$0xff]
    %v890 = vld [vmem:[#allocation6 + $0x1730] sm:$0xff]
    %v891 = vld [vmem:[#allocation6 + $0x1738] sm:$0xff]
    %v892 = vld [vmem:[#allocation6 + $0x1740] sm:$0xff]
    %v893 = vld [vmem:[#allocation6 + $0x1748] sm:$0xff]
    %v894 = vld [vmem:[#allocation6 + $0x1750] sm:$0xff]
    %v895 = vld [vmem:[#allocation6 + $0x1758] sm:$0xff]
    %v896 = vld [vmem:[#allocation6 + $0x1760] sm:$0xff]
    %v897 = vld [vmem:[#allocation6 + $0x1768] sm:$0xff]
    %v898 = vld [vmem:[#allocation6 + $0x1770] sm:$0xff]
    %v899 = vld [vmem:[#allocation6 + $0x1778] sm:$0xff]
    %v900 = vld [vmem:[#allocation6 + $0x1780] sm:$0xff]
    %v901 = vld [vmem:[#allocation6 + $0x1788] sm:$0xff]
    %v902 = vld [vmem:[#allocation6 + $0x1790] sm:$0xff]
    %v903 = vld [vmem:[#allocation6 + $0x1798] sm:$0xff]
    %v904 = vld [vmem:[#allocation6 + $0x17a0] sm:$0xff]
    %v905 = vld [vmem:[#allocation6 + $0x17a8] sm:$0xff]
    %v906 = vld [vmem:[#allocation6 + $0x17b0] sm:$0xff]
    %v907 = vld [vmem:[#allocation6 + $0x17b8] sm:$0xff]
    %v908 = vld [vmem:[#allocation6 + $0x17c0] sm:$0xff]
    %v909 = vld [vmem:[#allocation6 + $0x17c8] sm:$0xff]
    %v910 = vld [vmem:[#allocation6 + $0x17d0] sm:$0xff]
    %v911 = vld [vmem:[#allocation6 + $0x17d8] sm:$0xff]
    %v912 = vld [vmem:[#allocation6 + $0x17e0] sm:$0xff]
    %v913 = vld [vmem:[#allocation6 + $0x17e8] sm:$0xff]
    %v914 = vld [vmem:[#allocation6 + $0x17f0] sm:$0xff]
    %v915 = vld [vmem:[#allocation6 + $0x17f8] sm:$0xff]
    %v916 = vld [vmem:[#allocation6 + $0x1800] sm:$0xff]
    %v917 = vld [vmem:[#allocation6 + $0x1808] sm:$0xff]
    %v918 = vld [vmem:[#allocation6 + $0x1810] sm:$0xff]
    %v919 = vld [vmem:[#allocation6 + $0x1818] sm:$0xff]
    %v920 = vld [vmem:[#allocation6 + $0x1820] sm:$0xff]
    %v921 = vld [vmem:[#allocation6 + $0x1828] sm:$0xff]
    %v922 = vld [vmem:[#allocation6 + $0x1830] sm:$0xff]
    %v923 = vld [vmem:[#allocation6 + $0x1838] sm:$0xff]
    %v924 = vld [vmem:[#allocation6 + $0x1840] sm:$0xff]
    %v925 = vld [vmem:[#allocation6 + $0x1848] sm:$0xff]
    %v926 = vld [vmem:[#allocation6 + $0x1850] sm:$0xff]
    %v927 = vld [vmem:[#allocation6 + $0x1858] sm:$0xff]
    %v928 = vld [vmem:[#allocation6 + $0x1860] sm:$0xff]
    %v929 = vld [vmem:[#allocation6 + $0x1868] sm:$0xff]
    %v930 = vld [vmem:[#allocation6 + $0x1870] sm:$0xff]
    %v931 = vld [vmem:[#allocation6 + $0x1878] sm:$0xff]
    %v932 = vld [vmem:[#allocation6 + $0x1880] sm:$0xff]
    %v933 = vld [vmem:[#allocation6 + $0x1888] sm:$0xff]
    %v934 = vld [vmem:[#allocation6 + $0x1890] sm:$0xff]
    %v935 = vld [vmem:[#allocation6 + $0x1898] sm:$0xff]
    %v936 = vld [vmem:[#allocation6 + $0x18a0] sm:$0xff]
    %v937 = vld [vmem:[#allocation6 + $0x18a8] sm:$0xff]
    %v938 = vld [vmem:[#allocation6 + $0x18b0] sm:$0xff]
    %v939 = vld [vmem:[#allocation6 + $0x18b8] sm:$0xff]
    %v940 = vld [vmem:[#allocation6 + $0x18c0] sm:$0xff]
    %v941 = vld [vmem:[#allocation6 + $0x18c8] sm:$0xff]
    %v942 = vld [vmem:[#allocation6 + $0x18d0] sm:$0xff]
    %v943 = vld [vmem:[#allocation6 + $0x18d8] sm:$0xff]
    %v944 = vld [vmem:[#allocation6 + $0x18e0] sm:$0xff]
    %v945 = vld [vmem:[#allocation6 + $0x18e8] sm:$0xff]
    %v946 = vld [vmem:[#allocation6 + $0x18f0] sm:$0xff]
    %v947 = vld [vmem:[#allocation6 + $0x18f8] sm:$0xff]
    %v948 = vld [vmem:[#allocation6 + $0x1900] sm:$0xff]
    %v949 = vld [vmem:[#allocation6 + $0x1908] sm:$0xff]
    %v950 = vld [vmem:[#allocation6 + $0x1910] sm:$0xff]
    %v951 = vld [vmem:[#allocation6 + $0x1918] sm:$0xff]
    %v952 = vld [vmem:[#allocation6 + $0x1920] sm:$0xff]
    %v953 = vld [vmem:[#allocation6 + $0x1928] sm:$0xff]
    %v954 = vld [vmem:[#allocation6 + $0x1930] sm:$0xff]
    %v955 = vld [vmem:[#allocation6 + $0x1938] sm:$0xff]
    %v956 = vld [vmem:[#allocation6 + $0x1940] sm:$0xff]
    %v957 = vld [vmem:[#allocation6 + $0x1948] sm:$0xff]
    %v958 = vld [vmem:[#allocation6 + $0x1950] sm:$0xff]
    %v959 = vld [vmem:[#allocation6 + $0x1958] sm:$0xff]
    %v960 = vld [vmem:[#allocation6 + $0x1960] sm:$0xff]
    %v961 = vld [vmem:[#allocation6 + $0x1968] sm:$0xff]
    %v962 = vld [vmem:[#allocation6 + $0x1970] sm:$0xff]
    %v963 = vld [vmem:[#allocation6 + $0x1978] sm:$0xff]
    %v964 = vld [vmem:[#allocation6 + $0x1980] sm:$0xff]
    %v965 = vld [vmem:[#allocation6 + $0x1988] sm:$0xff]
    %v966 = vld [vmem:[#allocation6 + $0x1990] sm:$0xff]
    %v967 = vld [vmem:[#allocation6 + $0x1998] sm:$0xff]
    %v968 = vld [vmem:[#allocation6 + $0x19a0] sm:$0xff]
    %v969 = vld [vmem:[#allocation6 + $0x19a8] sm:$0xff]
    %v970 = vld [vmem:[#allocation6 + $0x19b0] sm:$0xff]
    %v971 = vld [vmem:[#allocation6 + $0x19b8] sm:$0xff]
    %v972 = vld [vmem:[#allocation6 + $0x19c0] sm:$0xff]
    %v973 = vld [vmem:[#allocation6 + $0x19c8] sm:$0xff]
    %v974 = vld [vmem:[#allocation6 + $0x19d0] sm:$0xff]
    %v975 = vld [vmem:[#allocation6 + $0x19d8] sm:$0xff]
    %v976 = vld [vmem:[#allocation6 + $0x19e0] sm:$0xff]
    %v977 = vld [vmem:[#allocation6 + $0x19e8] sm:$0xff]
    %v978 = vld [vmem:[#allocation6 + $0x19f0] sm:$0xff]
    %v979 = vld [vmem:[#allocation6 + $0x19f8] sm:$0xff]
    %v980 = vld [vmem:[#allocation6 + $0x1a00] sm:$0xff]
    %v981 = vld [vmem:[#allocation6 + $0x1a08] sm:$0xff]
    %v982 = vld [vmem:[#allocation6 + $0x1a10] sm:$0xff]
    %v983 = vld [vmem:[#allocation6 + $0x1a18] sm:$0xff]
    %v984 = vld [vmem:[#allocation6 + $0x1a20] sm:$0xff]
    %v985 = vld [vmem:[#allocation6 + $0x1a28] sm:$0xff]
    %v986 = vld [vmem:[#allocation6 + $0x1a30] sm:$0xff]
    %v987 = vld [vmem:[#allocation6 + $0x1a38] sm:$0xff]
    %v988 = vld [vmem:[#allocation6 + $0x1a40] sm:$0xff]
    %v989 = vld [vmem:[#allocation6 + $0x1a48] sm:$0xff]
    %v990 = vld [vmem:[#allocation6 + $0x1a50] sm:$0xff]
    %v991 = vld [vmem:[#allocation6 + $0x1a58] sm:$0xff]
    %v992 = vld [vmem:[#allocation6 + $0x1a60] sm:$0xff]
    %v993 = vld [vmem:[#allocation6 + $0x1a68] sm:$0xff]
    %v994 = vld [vmem:[#allocation6 + $0x1a70] sm:$0xff]
    %v995 = vld [vmem:[#allocation6 + $0x1a78] sm:$0xff]
    %v996 = vld [vmem:[#allocation6 + $0x1a80] sm:$0xff]
    %v997 = vld [vmem:[#allocation6 + $0x1a88] sm:$0xff]
    %v998 = vld [vmem:[#allocation6 + $0x1a90] sm:$0xff]
    %v999 = vld [vmem:[#allocation6 + $0x1a98] sm:$0xff]
    %v1000 = vld [vmem:[#allocation6 + $0x1aa0] sm:$0xff]
    %v1001 = vld [vmem:[#allocation6 + $0x1aa8] sm:$0xff]
    %v1002 = vld [vmem:[#allocation6 + $0x1ab0] sm:$0xff]
    %v1003 = vld [vmem:[#allocation6 + $0x1ab8] sm:$0xff]
    %v1004 = vld [vmem:[#allocation6 + $0x1ac0] sm:$0xff]
    %v1005 = vld [vmem:[#allocation6 + $0x1ac8] sm:$0xff]
    %v1006 = vld [vmem:[#allocation6 + $0x1ad0] sm:$0xff]
    %v1007 = vld [vmem:[#allocation6 + $0x1ad8] sm:$0xff]
    %v1008 = vld [vmem:[#allocation6 + $0x1ae0] sm:$0xff]
    %v1009 = vld [vmem:[#allocation6 + $0x1ae8] sm:$0xff]
    %v1010 = vld [vmem:[#allocation6 + $0x1af0] sm:$0xff]
    %v1011 = vld [vmem:[#allocation6 + $0x1af8] sm:$0xff]
    %v1012 = vld [vmem:[#allocation6 + $0x1b00] sm:$0xff]
    %v1013 = vld [vmem:[#allocation6 + $0x1b08] sm:$0xff]
    %v1014 = vld [vmem:[#allocation6 + $0x1b10] sm:$0xff]
    %v1015 = vld [vmem:[#allocation6 + $0x1b18] sm:$0xff]
    %v1016 = vld [vmem:[#allocation6 + $0x1b20] sm:$0xff]
    %v1017 = vld [vmem:[#allocation6 + $0x1b28] sm:$0xff]
    %v1018 = vld [vmem:[#allocation6 + $0x1b30] sm:$0xff]
    %v1019 = vld [vmem:[#allocation6 + $0x1b38] sm:$0xff]
    %v1020 = vld [vmem:[#allocation6 + $0x1b40] sm:$0xff]
    %v1021 = vld [vmem:[#allocation6 + $0x1b48] sm:$0xff]
    %v1022 = vld [vmem:[#allocation6 + $0x1b50] sm:$0xff]
    %v1023 = vld [vmem:[#allocation6 + $0x1b58] sm:$0xff]
    %v1024 = vld [vmem:[#allocation6 + $0x1b60] sm:$0xff]
    %v1025 = vld [vmem:[#allocation6 + $0x1b68] sm:$0xff]
    %v1026 = vld [vmem:[#allocation6 + $0x1b70] sm:$0xff]
    %v1027 = vld [vmem:[#allocation6 + $0x1b78] sm:$0xff]
    %v1028 = vld [vmem:[#allocation6 + $0x1b80] sm:$0xff]
    %v1029 = vld [vmem:[#allocation6 + $0x1b88] sm:$0xff]
    %v1030 = vld [vmem:[#allocation6 + $0x1b90] sm:$0xff]
    %v1031 = vld [vmem:[#allocation6 + $0x1b98] sm:$0xff]
    %v1032 = vld [vmem:[#allocation6 + $0x1ba0] sm:$0xff]
    %v1033 = vld [vmem:[#allocation6 + $0x1ba8] sm:$0xff]
    %v1034 = vld [vmem:[#allocation6 + $0x1bb0] sm:$0xff]
    %v1035 = vld [vmem:[#allocation6 + $0x1bb8] sm:$0xff]
    %v1036 = vld [vmem:[#allocation6 + $0x1bc0] sm:$0xff]
    %v1037 = vld [vmem:[#allocation6 + $0x1bc8] sm:$0xff]
    %v1038 = vld [vmem:[#allocation6 + $0x1bd0] sm:$0xff]
    %v1039 = vld [vmem:[#allocation6 + $0x1bd8] sm:$0xff]
    %v1040 = vld [vmem:[#allocation6 + $0x1be0] sm:$0xff]
    %v1041 = vld [vmem:[#allocation6 + $0x1be8] sm:$0xff]
    %v1042 = vld [vmem:[#allocation6 + $0x1bf0] sm:$0xff]
    %v1043 = vld [vmem:[#allocation6 + $0x1bf8] sm:$0xff]
    %v1044 = vld [vmem:[#allocation6 + $0x1c00] sm:$0xff]
    %v1045 = vld [vmem:[#allocation6 + $0x1c08] sm:$0xff]
    %v1046 = vld [vmem:[#allocation6 + $0x1c10] sm:$0xff]
    %v1047 = vld [vmem:[#allocation6 + $0x1c18] sm:$0xff]
    %v1048 = vld [vmem:[#allocation6 + $0x1c20] sm:$0xff]
    %v1049 = vld [vmem:[#allocation6 + $0x1c28] sm:$0xff]
    %v1050 = vld [vmem:[#allocation6 + $0x1c30] sm:$0xff]
    %v1051 = vld [vmem:[#allocation6 + $0x1c38] sm:$0xff]
    %v1052 = vld [vmem:[#allocation6 + $0x1c40] sm:$0xff]
    %v1053 = vld [vmem:[#allocation6 + $0x1c48] sm:$0xff]
    %v1054 = vld [vmem:[#allocation6 + $0x1c50] sm:$0xff]
    %v1055 = vld [vmem:[#allocation6 + $0x1c58] sm:$0xff]
    %v1056 = vld [vmem:[#allocation6 + $0x1c60] sm:$0xff]
    %v1057 = vld [vmem:[#allocation6 + $0x1c68] sm:$0xff]
    %v1058 = vld [vmem:[#allocation6 + $0x1c70] sm:$0xff]
    %v1059 = vld [vmem:[#allocation6 + $0x1c78] sm:$0xff]
    %v1060 = vld [vmem:[#allocation6 + $0x1c80] sm:$0xff]
    %v1061 = vld [vmem:[#allocation6 + $0x1c88] sm:$0xff]
    %v1062 = vld [vmem:[#allocation6 + $0x1c90] sm:$0xff]
    %v1063 = vld [vmem:[#allocation6 + $0x1c98] sm:$0xff]
    %v1064 = vld [vmem:[#allocation6 + $0x1ca0] sm:$0xff]
    %v1065 = vld [vmem:[#allocation6 + $0x1ca8] sm:$0xff]
    %v1066 = vld [vmem:[#allocation6 + $0x1cb0] sm:$0xff]
    %v1067 = vld [vmem:[#allocation6 + $0x1cb8] sm:$0xff]
    %v1068 = vld [vmem:[#allocation6 + $0x1cc0] sm:$0xff]
    %v1069 = vld [vmem:[#allocation6 + $0x1cc8] sm:$0xff]
    %v1070 = vld [vmem:[#allocation6 + $0x1cd0] sm:$0xff]
    %v1071 = vld [vmem:[#allocation6 + $0x1cd8] sm:$0xff]
    %v1072 = vld [vmem:[#allocation6 + $0x1ce0] sm:$0xff]
    %v1073 = vld [vmem:[#allocation6 + $0x1ce8] sm:$0xff]
    %v1074 = vld [vmem:[#allocation6 + $0x1cf0] sm:$0xff]
    %v1075 = vld [vmem:[#allocation6 + $0x1cf8] sm:$0xff]
    %v1076 = vld [vmem:[#allocation6 + $0x1d00] sm:$0xff]
    %v1077 = vld [vmem:[#allocation6 + $0x1d08] sm:$0xff]
    %v1078 = vld [vmem:[#allocation6 + $0x1d10] sm:$0xff]
    %v1079 = vld [vmem:[#allocation6 + $0x1d18] sm:$0xff]
    %v1080 = vld [vmem:[#allocation6 + $0x1d20] sm:$0xff]
    %v1081 = vld [vmem:[#allocation6 + $0x1d28] sm:$0xff]
    %v1082 = vld [vmem:[#allocation6 + $0x1d30] sm:$0xff]
    %v1083 = vld [vmem:[#allocation6 + $0x1d38] sm:$0xff]
    %v1084 = vld [vmem:[#allocation6 + $0x1d40] sm:$0xff]
    %v1085 = vld [vmem:[#allocation6 + $0x1d48] sm:$0xff]
    %v1086 = vld [vmem:[#allocation6 + $0x1d50] sm:$0xff]
    %v1087 = vld [vmem:[#allocation6 + $0x1d58] sm:$0xff]
    %v1088 = vld [vmem:[#allocation6 + $0x1d60] sm:$0xff]
    %v1089 = vld [vmem:[#allocation6 + $0x1d68] sm:$0xff]
    %v1090 = vld [vmem:[#allocation6 + $0x1d70] sm:$0xff]
    %v1091 = vld [vmem:[#allocation6 + $0x1d78] sm:$0xff]
    %v1092 = vld [vmem:[#allocation6 + $0x1d80] sm:$0xff]
    %v1093 = vld [vmem:[#allocation6 + $0x1d88] sm:$0xff]
    %v1094 = vld [vmem:[#allocation6 + $0x1d90] sm:$0xff]
    %v1095 = vld [vmem:[#allocation6 + $0x1d98] sm:$0xff]
    %v1096 = vld [vmem:[#allocation6 + $0x1da0] sm:$0xff]
    %v1097 = vld [vmem:[#allocation6 + $0x1da8] sm:$0xff]
    %v1098 = vld [vmem:[#allocation6 + $0x1db0] sm:$0xff]
    %v1099 = vld [vmem:[#allocation6 + $0x1db8] sm:$0xff]
    %v1100 = vld [vmem:[#allocation6 + $0x1dc0] sm:$0xff]
    %v1101 = vld [vmem:[#allocation6 + $0x1dc8] sm:$0xff]
    %v1102 = vld [vmem:[#allocation6 + $0x1dd0] sm:$0xff]
    %v1103 = vld [vmem:[#allocation6 + $0x1dd8] sm:$0xff]
    %v1104 = vld [vmem:[#allocation6 + $0x1de0] sm:$0xff]
    %v1105 = vld [vmem:[#allocation6 + $0x1de8] sm:$0xff]
    %v1106 = vld [vmem:[#allocation6 + $0x1df0] sm:$0xff]
    %v1107 = vld [vmem:[#allocation6 + $0x1df8] sm:$0xff]
    %v1108 = vld [vmem:[#allocation6 + $0x1e00] sm:$0xff]
    %v1109 = vld [vmem:[#allocation6 + $0x1e08] sm:$0xff]
    %v1110 = vld [vmem:[#allocation6 + $0x1e10] sm:$0xff]
    %v1111 = vld [vmem:[#allocation6 + $0x1e18] sm:$0xff]
    %v1112 = vld [vmem:[#allocation6 + $0x1e20] sm:$0xff]
    %v1113 = vld [vmem:[#allocation6 + $0x1e28] sm:$0xff]
    %v1114 = vld [vmem:[#allocation6 + $0x1e30] sm:$0xff]
    %v1115 = vld [vmem:[#allocation6 + $0x1e38] sm:$0xff]
    %v1116 = vld [vmem:[#allocation6 + $0x1e40] sm:$0xff]
    %v1117 = vld [vmem:[#allocation6 + $0x1e48] sm:$0xff]
    %v1118 = vld [vmem:[#allocation6 + $0x1e50] sm:$0xff]
    %v1119 = vld [vmem:[#allocation6 + $0x1e58] sm:$0xff]
    %v1120 = vld [vmem:[#allocation6 + $0x1e60] sm:$0xff]
    %v1121 = vld [vmem:[#allocation6 + $0x1e68] sm:$0xff]
    %v1122 = vld [vmem:[#allocation6 + $0x1e70] sm:$0xff]
    %v1123 = vld [vmem:[#allocation6 + $0x1e78] sm:$0xff]
    %v1124 = vld [vmem:[#allocation6 + $0x1e80] sm:$0xff]
    %v1125 = vld [vmem:[#allocation6 + $0x1e88] sm:$0xff]
    %v1126 = vld [vmem:[#allocation6 + $0x1e90] sm:$0xff]
    %v1127 = vld [vmem:[#allocation6 + $0x1e98] sm:$0xff]
    %v1128 = vld [vmem:[#allocation6 + $0x1ea0] sm:$0xff]
    %v1129 = vld [vmem:[#allocation6 + $0x1ea8] sm:$0xff]
    %v1130 = vld [vmem:[#allocation6 + $0x1eb0] sm:$0xff]
    %v1131 = vld [vmem:[#allocation6 + $0x1eb8] sm:$0xff]
    %v1132 = vld [vmem:[#allocation6 + $0x1ec0] sm:$0xff]
    %v1133 = vld [vmem:[#allocation6 + $0x1ec8] sm:$0xff]
    %v1134 = vld [vmem:[#allocation6 + $0x1ed0] sm:$0xff]
    %v1135 = vld [vmem:[#allocation6 + $0x1ed8] sm:$0xff]
    %v1136 = vld [vmem:[#allocation6 + $0x1ee0] sm:$0xff]
    %v1137 = vld [vmem:[#allocation6 + $0x1ee8] sm:$0xff]
    %v1138 = vld [vmem:[#allocation6 + $0x1ef0] sm:$0xff]
    %v1139 = vld [vmem:[#allocation6 + $0x1ef8] sm:$0xff]
    %v1140 = vld [vmem:[#allocation6 + $0x1f00] sm:$0xff]
    %v1141 = vld [vmem:[#allocation6 + $0x1f08] sm:$0xff]
    %v1142 = vld [vmem:[#allocation6 + $0x1f10] sm:$0xff]
    %v1143 = vld [vmem:[#allocation6 + $0x1f18] sm:$0xff]
    %v1144 = vld [vmem:[#allocation6 + $0x1f20] sm:$0xff]
    %v1145 = vld [vmem:[#allocation6 + $0x1f28] sm:$0xff]
    %v1146 = vld [vmem:[#allocation6 + $0x1f30] sm:$0xff]
    %v1147 = vld [vmem:[#allocation6 + $0x1f38] sm:$0xff]
    %v1148 = vld [vmem:[#allocation6 + $0x1f40] sm:$0xff]
    %v1149 = vld [vmem:[#allocation6 + $0x1f48] sm:$0xff]
    %v1150 = vld [vmem:[#allocation6 + $0x1f50] sm:$0xff]
    %v1151 = vld [vmem:[#allocation6 + $0x1f58] sm:$0xff]
    %v1152 = vld [vmem:[#allocation6 + $0x1f60] sm:$0xff]
    %v1153 = vld [vmem:[#allocation6 + $0x1f68] sm:$0xff]
    %v1154 = vld [vmem:[#allocation6 + $0x1f70] sm:$0xff]
    %v1155 = vld [vmem:[#allocation6 + $0x1f78] sm:$0xff]
    %v1156 = vld [vmem:[#allocation6 + $0x1f80] sm:$0xff]
    %v1157 = vld [vmem:[#allocation6 + $0x1f88] sm:$0xff]
    %v1158 = vld [vmem:[#allocation6 + $0x1f90] sm:$0xff]
    %v1159 = vld [vmem:[#allocation6 + $0x1f98] sm:$0xff]
    %v1160 = vld [vmem:[#allocation6 + $0x1fa0] sm:$0xff]
    %v1161 = vld [vmem:[#allocation6 + $0x1fa8] sm:$0xff]
    %v1162 = vld [vmem:[#allocation6 + $0x1fb0] sm:$0xff]
    %v1163 = vld [vmem:[#allocation6 + $0x1fb8] sm:$0xff]
    %v1164 = vld [vmem:[#allocation6 + $0x1fc0] sm:$0xff]
    %v1165 = vld [vmem:[#allocation6 + $0x1fc8] sm:$0xff]
    %v1166 = vld [vmem:[#allocation6 + $0x1fd0] sm:$0xff]
    %v1167 = vld [vmem:[#allocation6 + $0x1fd8] sm:$0xff]
    %v1168 = vld [vmem:[#allocation6 + $0x1fe0] sm:$0xff]
    %v1169 = vld [vmem:[#allocation6 + $0x1fe8] sm:$0xff]
    %v1170 = vld [vmem:[#allocation6 + $0x1ff0] sm:$0xff]
    %v1171 = vld [vmem:[#allocation6 + $0x1ff8] sm:$0xff]
    %1172 = vmatprep.subr.mxu0 %v149
    %1173 = vmatpush1.msra.mxu0 %v148
    %1174 = vmatprep.subr.mxu0 %v157
    %1175 = vmatpush1.msra.mxu0 %v156
    %1176 = vmatprep.subr.mxu0 %v165
    %1177 = vmatpush1.msra.mxu0 %v164
    %1178 = vmatprep.subr.mxu0 %v173
    %1179 = vmatpush1.msra.mxu0 %v172
    %1180 = vmatprep.subr.mxu0 %v181
    %1181 = vmatpush1.msra.mxu0 %v180
    %1182 = vmatprep.subr.mxu0 %v189
    %1183 = vmatpush1.msra.mxu0 %v188
    %1184 = vmatprep.subr.mxu0 %v197
    %1185 = vmatpush1.msra.mxu0 %v196
    %1186 = vmatprep.subr.mxu0 %v205
    %1187 = vmatpush1.msra.mxu0 %v204
    %1188 = vmatprep.subr.mxu0 %v213
    %1189 = vmatpush1.msra.mxu0 %v212
    %1190 = vmatprep.subr.mxu0 %v221
    %1191 = vmatpush1.msra.mxu0 %v220
    %1192 = vmatprep.subr.mxu0 %v229
    %1193 = vmatpush1.msra.mxu0 %v228
    %1194 = vmatprep.subr.mxu0 %v237
    %1195 = vmatpush1.msra.mxu0 %v236
    %1196 = vmatprep.subr.mxu0 %v245
    %1197 = vmatpush1.msra.mxu0 %v244
    %1198 = vmatprep.subr.mxu0 %v253
    %1199 = vmatpush1.msra.mxu0 %v252
    %1200 = vmatprep.subr.mxu0 %v261
    %1201 = vmatpush1.msra.mxu0 %v260
    %1202 = vmatprep.subr.mxu0 %v269
    %1203 = vmatpush1.msra.mxu0 %v268
    %1204 = vmatprep.subr.mxu0 %v277
    %1205 = vmatpush1.msra.mxu0 %v276
    %1206 = vmatprep.subr.mxu0 %v285
    %1207 = vmatpush1.msra.mxu0 %v284
    %1208 = vmatprep.subr.mxu0 %v293
    %1209 = vmatpush1.msra.mxu0 %v292
    %1210 = vmatprep.subr.mxu0 %v301
    %1211 = vmatpush1.msra.mxu0 %v300
    %1212 = vmatprep.subr.mxu0 %v309
    %1213 = vmatpush1.msra.mxu0 %v308
    %1214 = vmatprep.subr.mxu0 %v317
    %1215 = vmatpush1.msra.mxu0 %v316
    %1216 = vmatprep.subr.mxu0 %v325
    %1217 = vmatpush1.msra.mxu0 %v324
    %1218 = vmatprep.subr.mxu0 %v333
    %1219 = vmatpush1.msra.mxu0 %v332
    %1220 = vmatprep.subr.mxu0 %v341
    %1221 = vmatpush1.msra.mxu0 %v340
    %1222 = vmatprep.subr.mxu0 %v349
    %1223 = vmatpush1.msra.mxu0 %v348
    %1224 = vmatprep.subr.mxu0 %v357
    %1225 = vmatpush1.msra.mxu0 %v356
    %1226 = vmatprep.subr.mxu0 %v365
    %1227 = vmatpush1.msra.mxu0 %v364
    %1228 = vmatprep.subr.mxu0 %v373
    %1229 = vmatpush1.msra.mxu0 %v372
    %1230 = vmatprep.subr.mxu0 %v381
    %1231 = vmatpush1.msra.mxu0 %v380
    %1232 = vmatprep.subr.mxu0 %v389
    %1233 = vmatpush1.msra.mxu0 %v388
    %1234 = vmatprep.subr.mxu0 %v397
    %1235 = vmatpush1.msra.mxu0 %v396
    %1236 = vmatprep.mubr.f32.mxu0 %v117
    %1237 = vmatmul.mubr.f32.gmra.mrb[0].mxu0 %v116
    %v1238 = vpop.f32.mrb[0].mxu0
    %v1239 = vadd.f32 0.0, %v1238
    %v1240 = vpop.f32.mrb[0].mxu0
    %v1241 = vadd.f32 0.0, %v1240
    %1242 = vmatprep.mubr.f32.mxu0 %v125
    %1243 = vmatmul.mubr.f32.gmra.mrb[0].mxu0 %v124
    %v1244 = vpop.f32.mrb[0].mxu0
    %v1245 = vadd.f32 0.0, %v1244
    %v1246 = vpop.f32.mrb[0].mxu0
    %v1247 = vadd.f32 0.0, %v1246
    %1248 = vdwg.mxu0
    %1249 = vmatprep.subr.mxu0 %v405
    %1250 = vmatpush1.msra.mxu0 %v404
    %1251 = vmatprep.subr.mxu0 %v413
    %1252 = vmatpush1.msra.mxu0 %v412
    %1253 = vmatprep.subr.mxu0 %v421
    %1254 = vmatpush1.msra.mxu0 %v420
    %1255 = vmatprep.subr.mxu0 %v429
    %1256 = vmatpush1.msra.mxu0 %v428
    %1257 = vmatprep.subr.mxu0 %v437
    %1258 = vmatpush1.msra.mxu0 %v436
    %1259 = vmatprep.subr.mxu0 %v445
    %1260 = vmatpush1.msra.mxu0 %v444
    %1261 = vmatprep.subr.mxu0 %v453
    %1262 = vmatpush1.msra.mxu0 %v452
    %1263 = vmatprep.subr.mxu0 %v461
    %1264 = vmatpush1.msra.mxu0 %v460
    %1265 = vmatprep.subr.mxu0 %v469
    %1266 = vmatpush1.msra.mxu0 %v468
    %1267 = vmatprep.subr.mxu0 %v477
    %1268 = vmatpush1.msra.mxu0 %v476
    %1269 = vmatprep.subr.mxu0 %v485
    %1270 = vmatpush1.msra.mxu0 %v484
    %1271 = vmatprep.subr.mxu0 %v493
    %1272 = vmatpush1.msra.mxu0 %v492
    %1273 = vmatprep.subr.mxu0 %v501
    %1274 = vmatpush1.msra.mxu0 %v500
    %1275 = vmatprep.subr.mxu0 %v509
    %1276 = vmatpush1.msra.mxu0 %v508
    %1277 = vmatprep.subr.mxu0 %v517
    %1278 = vmatpush1.msra.mxu0 %v516
    %1279 = vmatprep.subr.mxu0 %v525
    %1280 = vmatpush1.msra.mxu0 %v524
    %1281 = vmatprep.subr.mxu0 %v533
    %1282 = vmatpush1.msra.mxu0 %v532
    %1283 = vmatprep.subr.mxu0 %v541
    %1284 = vmatpush1.msra.mxu0 %v540
    %1285 = vmatprep.subr.mxu0 %v549
    %1286 = vmatpush1.msra.mxu0 %v548
    %1287 = vmatprep.subr.mxu0 %v557
    %1288 = vmatpush1.msra.mxu0 %v556
    %1289 = vmatprep.subr.mxu0 %v565
    %1290 = vmatpush1.msra.mxu0 %v564
    %1291 = vmatprep.subr.mxu0 %v573
    %1292 = vmatpush1.msra.mxu0 %v572
    %1293 = vmatprep.subr.mxu0 %v581
    %1294 = vmatpush1.msra.mxu0 %v580
    %1295 = vmatprep.subr.mxu0 %v589
    %1296 = vmatpush1.msra.mxu0 %v588
    %1297 = vmatprep.subr.mxu0 %v597
    %1298 = vmatpush1.msra.mxu0 %v596
    %1299 = vmatprep.subr.mxu0 %v605
    %1300 = vmatpush1.msra.mxu0 %v604
    %1301 = vmatprep.subr.mxu0 %v613
    %1302 = vmatpush1.msra.mxu0 %v612
    %1303 = vmatprep.subr.mxu0 %v621
    %1304 = vmatpush1.msra.mxu0 %v620
    %1305 = vmatprep.subr.mxu0 %v629
    %1306 = vmatpush1.msra.mxu0 %v628
    %1307 = vmatprep.subr.mxu0 %v637
    %1308 = vmatpush1.msra.mxu0 %v636
    %1309 = vmatprep.subr.mxu0 %v645
    %1310 = vmatpush1.msra.mxu0 %v644
    %1311 = vmatprep.subr.mxu0 %v653
    %1312 = vmatpush1.msra.mxu0 %v652
    %1313 = vmatprep.mubr.f32.mxu0 %v119
    %1314 = vmatmul.mubr.f32.gmra.mrb[0].mxu0 %v118
    %v1315 = vpop.f32.mrb[0].mxu0
    %v1316 = vadd.f32 %v1239, %v1315
    %v1317 = vpop.f32.mrb[0].mxu0
    %v1318 = vadd.f32 %v1241, %v1317
    %1319 = vmatprep.mubr.f32.mxu0 %v127
    %1320 = vmatmul.mubr.f32.gmra.mrb[0].mxu0 %v126
    %v1321 = vpop.f32.mrb[0].mxu0
    %v1322 = vadd.f32 %v1245, %v1321
    %v1323 = vpop.f32.mrb[0].mxu0
    %v1324 = vadd.f32 %v1247, %v1323
    %1325 = vdwg.mxu0
    %1326 = vmatprep.subr.mxu0 %v661
    %1327 = vmatpush1.msra.mxu0 %v660
    %1328 = vmatprep.subr.mxu0 %v669
    %1329 = vmatpush1.msra.mxu0 %v668
    %1330 = vmatprep.subr.mxu0 %v677
    %1331 = vmatpush1.msra.mxu0 %v676
    %1332 = vmatprep.subr.mxu0 %v685
    %1333 = vmatpush1.msra.mxu0 %v684
    %1334 = vmatprep.subr.mxu0 %v693
    %1335 = vmatpush1.msra.mxu0 %v692
    %1336 = vmatprep.subr.mxu0 %v701
    %1337 = vmatpush1.msra.mxu0 %v700
    %1338 = vmatprep.subr.mxu0 %v709
    %1339 = vmatpush1.msra.mxu0 %v708
    %1340 = vmatprep.subr.mxu0 %v717
    %1341 = vmatpush1.msra.mxu0 %v716
    %1342 = vmatprep.subr.mxu0 %v725
    %1343 = vmatpush1.msra.mxu0 %v724
    %1344 = vmatprep.subr.mxu0 %v733
    %1345 = vmatpush1.msra.mxu0 %v732
    %1346 = vmatprep.subr.mxu0 %v741
    %1347 = vmatpush1.msra.mxu0 %v740
    %1348 = vmatprep.subr.mxu0 %v749
    %1349 = vmatpush1.msra.mxu0 %v748
    %1350 = vmatprep.subr.mxu0 %v757
    %1351 = vmatpush1.msra.mxu0 %v756
    %1352 = vmatprep.subr.mxu0 %v765
    %1353 = vmatpush1.msra.mxu0 %v764
    %1354 = vmatprep.subr.mxu0 %v773
    %1355 = vmatpush1.msra.mxu0 %v772
    %1356 = vmatprep.subr.mxu0 %v781
    %1357 = vmatpush1.msra.mxu0 %v780
    %1358 = vmatprep.subr.mxu0 %v789
    %1359 = vmatpush1.msra.mxu0 %v788
    %1360 = vmatprep.subr.mxu0 %v797
    %1361 = vmatpush1.msra.mxu0 %v796
    %1362 = vmatprep.subr.mxu0 %v805
    %1363 = vmatpush1.msra.mxu0 %v804
    %1364 = vmatprep.subr.mxu0 %v813
    %1365 = vmatpush1.msra.mxu0 %v812
    %1366 = vmatprep.subr.mxu0 %v821
    %1367 = vmatpush1.msra.mxu0 %v820
    %1368 = vmatprep.subr.mxu0 %v829
    %1369 = vmatpush1.msra.mxu0 %v828
    %1370 = vmatprep.subr.mxu0 %v837
    %1371 = vmatpush1.msra.mxu0 %v836
    %1372 = vmatprep.subr.mxu0 %v845
    %1373 = vmatpush1.msra.mxu0 %v844
    %1374 = vmatprep.subr.mxu0 %v853
    %1375 = vmatpush1.msra.mxu0 %v852
    %1376 = vmatprep.subr.mxu0 %v861
    %1377 = vmatpush1.msra.mxu0 %v860
    %1378 = vmatprep.subr.mxu0 %v869
    %1379 = vmatpush1.msra.mxu0 %v868
    %1380 = vmatprep.subr.mxu0 %v877
    %1381 = vmatpush1.msra.mxu0 %v876
    %1382 = vmatprep.subr.mxu0 %v885
    %1383 = vmatpush1.msra.mxu0 %v884
    %1384 = vmatprep.subr.mxu0 %v893
    %1385 = vmatpush1.msra.mxu0 %v892
    %1386 = vmatprep.subr.mxu0 %v901
    %1387 = vmatpush1.msra.mxu0 %v900
    %1388 = vmatprep.subr.mxu0 %v909
    %1389 = vmatpush1.msra.mxu0 %v908
    %1390 = vmatprep.mubr.f32.mxu0 %v121
    %1391 = vmatmul.mubr.f32.gmra.mrb[0].mxu0 %v120
    %v1392 = vpop.f32.mrb[0].mxu0
    %v1393 = vadd.f32 %v1316, %v1392
    %v1394 = vpop.f32.mrb[0].mxu0
    %v1395 = vadd.f32 %v1318, %v1394
    %1396 = vmatprep.mubr.f32.mxu0 %v129
    %1397 = vmatmul.mubr.f32.gmra.mrb[0].mxu0 %v128
    %v1398 = vpop.f32.mrb[0].mxu0
    %v1399 = vadd.f32 %v1322, %v1398
    %v1400 = vpop.f32.mrb[0].mxu0
    %v1401 = vadd.f32 %v1324, %v1400
    %1402 = vdwg.mxu0
    %1403 = vmatprep.subr.mxu0 %v917
    %1404 = vmatpush1.msra.mxu0 %v916
    %1405 = vmatprep.subr.mxu0 %v925
    %1406 = vmatpush1.msra.mxu0 %v924
    %1407 = vmatprep.subr.mxu0 %v933
    %1408 = vmatpush1.msra.mxu0 %v932
    %1409 = vmatprep.subr.mxu0 %v941
    %1410 = vmatpush1.msra.mxu0 %v940
    %1411 = vmatprep.subr.mxu0 %v949
    %1412 = vmatpush1.msra.mxu0 %v948
    %1413 = vmatprep.subr.mxu0 %v957
    %1414 = vmatpush1.msra.mxu0 %v956
    %1415 = vmatprep.subr.mxu0 %v965
    %1416 = vmatpush1.msra.mxu0 %v964
    %1417 = vmatprep.subr.mxu0 %v973
    %1418 = vmatpush1.msra.mxu0 %v972
    %1419 = vmatprep.subr.mxu0 %v981
    %1420 = vmatpush1.msra.mxu0 %v980
    %1421 = vmatprep.subr.mxu0 %v989
    %1422 = vmatpush1.msra.mxu0 %v988
    %1423 = vmatprep.subr.mxu0 %v997
    %1424 = vmatpush1.msra.mxu0 %v996
    %1425 = vmatprep.subr.mxu0 %v1005
    %1426 = vmatpush1.msra.mxu0 %v1004
    %1427 = vmatprep.subr.mxu0 %v1013
    %1428 = vmatpush1.msra.mxu0 %v1012
    %1429 = vmatprep.subr.mxu0 %v1021
    %1430 = vmatpush1.msra.mxu0 %v1020
    %1431 = vmatprep.subr.mxu0 %v1029
    %1432 = vmatpush1.msra.mxu0 %v1028
    %1433 = vmatprep.subr.mxu0 %v1037
    %1434 = vmatpush1.msra.mxu0 %v1036
    %1435 = vmatprep.subr.mxu0 %v1045
    %1436 = vmatpush1.msra.mxu0 %v1044
    %1437 = vmatprep.subr.mxu0 %v1053
    %1438 = vmatpush1.msra.mxu0 %v1052
    %1439 = vmatprep.subr.mxu0 %v1061
    %1440 = vmatpush1.msra.mxu0 %v1060
    %1441 = vmatprep.subr.mxu0 %v1069
    %1442 = vmatpush1.msra.mxu0 %v1068
    %1443 = vmatprep.subr.mxu0 %v1077
    %1444 = vmatpush1.msra.mxu0 %v1076
    %1445 = vmatprep.subr.mxu0 %v1085
    %1446 = vmatpush1.msra.mxu0 %v1084
    %1447 = vmatprep.subr.mxu0 %v1093
    %1448 = vmatpush1.msra.mxu0 %v1092
    %1449 = vmatprep.subr.mxu0 %v1101
    %1450 = vmatpush1.msra.mxu0 %v1100
    %1451 = vmatprep.subr.mxu0 %v1109
    %1452 = vmatpush1.msra.mxu0 %v1108
    %1453 = vmatprep.subr.mxu0 %v1117
    %1454 = vmatpush1.msra.mxu0 %v1116
    %1455 = vmatprep.subr.mxu0 %v1125
    %1456 = vmatpush1.msra.mxu0 %v1124
    %1457 = vmatprep.subr.mxu0 %v1133
    %1458 = vmatpush1.msra.mxu0 %v1132
    %1459 = vmatprep.subr.mxu0 %v1141
    %1460 = vmatpush1.msra.mxu0 %v1140
    %1461 = vmatprep.subr.mxu0 %v1149
    %1462 = vmatpush1.msra.mxu0 %v1148
    %1463 = vmatprep.subr.mxu0 %v1157
    %1464 = vmatpush1.msra.mxu0 %v1156
    %1465 = vmatprep.subr.mxu0 %v1165
    %1466 = vmatpush1.msra.mxu0 %v1164
    %1467 = vmatprep.mubr.f32.mxu0 %v123
    %1468 = vmatmul.mubr.f32.gmra.mrb[0].mxu0 %v122
    %v1469 = vpop.f32.mrb[0].mxu0
    %v1470 = vadd.f32 %v1393, %v1469
    %v1471 = vpop.f32.mrb[0].mxu0
    %v1472 = vadd.f32 %v1395, %v1471
    %1473 = vmatprep.mubr.f32.mxu0 %v131
    %1474 = vmatmul.mubr.f32.gmra.mrb[0].mxu0 %v130
    %v1475 = vpop.f32.mrb[0].mxu0
    %v1476 = vadd.f32 %v1399, %v1475
    %v1477 = vpop.f32.mrb[0].mxu0
    %v1478 = vadd.f32 %v1401, %v1477
    %1479 = vdwg.mxu0
    %1480 = vmatprep.subr.mxu0 %v151
    %1481 = vmatpush1.msra.mxu0 %v150
    %1482 = vmatprep.subr.mxu0 %v159
    %1483 = vmatpush1.msra.mxu0 %v158
    %1484 = vmatprep.subr.mxu0 %v167
    %1485 = vmatpush1.msra.mxu0 %v166
    %1486 = vmatprep.subr.mxu0 %v175
    %1487 = vmatpush1.msra.mxu0 %v174
    %1488 = vmatprep.subr.mxu0 %v183
    %1489 = vmatpush1.msra.mxu0 %v182
    %1490 = vmatprep.subr.mxu0 %v191
    %1491 = vmatpush1.msra.mxu0 %v190
    %1492 = vmatprep.subr.mxu0 %v199
    %1493 = vmatpush1.msra.mxu0 %v198
    %1494 = vmatprep.subr.mxu0 %v207
    %1495 = vmatpush1.msra.mxu0 %v206
    %1496 = vmatprep.subr.mxu0 %v215
    %1497 = vmatpush1.msra.mxu0 %v214
    %1498 = vmatprep.subr.mxu0 %v223
    %1499 = vmatpush1.msra.mxu0 %v222
    %1500 = vmatprep.subr.mxu0 %v231
    %1501 = vmatpush1.msra.mxu0 %v230
    %1502 = vmatprep.subr.mxu0 %v239
    %1503 = vmatpush1.msra.mxu0 %v238
    %1504 = vmatprep.subr.mxu0 %v247
    %1505 = vmatpush1.msra.mxu0 %v246
    %1506 = vmatprep.subr.mxu0 %v255
    %1507 = vmatpush1.msra.mxu0 %v254
    %1508 = vmatprep.subr.mxu0 %v263
    %1509 = vmatpush1.msra.mxu0 %v262
    %1510 = vmatprep.subr.mxu0 %v271
    %1511 = vmatpush1.msra.mxu0 %v270
    %1512 = vmatprep.subr.mxu0 %v279
    %1513 = vmatpush1.msra.mxu0 %v278
    %1514 = vmatprep.subr.mxu0 %v287
    %1515 = vmatpush1.msra.mxu0 %v286
    %1516 = vmatprep.subr.mxu0 %v295
    %1517 = vmatpush1.msra.mxu0 %v294
    %1518 = vmatprep.subr.mxu0 %v303
    %1519 = vmatpush1.msra.mxu0 %v302
    %1520 = vmatprep.subr.mxu0 %v311
    %1521 = vmatpush1.msra.mxu0 %v310
    %1522 = vmatprep.subr.mxu0 %v319
    %1523 = vmatpush1.msra.mxu0 %v318
    %1524 = vmatprep.subr.mxu0 %v327
    %1525 = vmatpush1.msra.mxu0 %v326
    %1526 = vmatprep.subr.mxu0 %v335
    %1527 = vmatpush1.msra.mxu0 %v334
    %1528 = vmatprep.subr.mxu0 %v343
    %1529 = vmatpush1.msra.mxu0 %v342
    %1530 = vmatprep.subr.mxu0 %v351
    %1531 = vmatpush1.msra.mxu0 %v350
    %1532 = vmatprep.subr.mxu0 %v359
    %1533 = vmatpush1.msra.mxu0 %v358
    %1534 = vmatprep.subr.mxu0 %v367
    %1535 = vmatpush1.msra.mxu0 %v366
    %1536 = vmatprep.subr.mxu0 %v375
    %1537 = vmatpush1.msra.mxu0 %v374
    %1538 = vmatprep.subr.mxu0 %v383
    %1539 = vmatpush1.msra.mxu0 %v382
    %1540 = vmatprep.subr.mxu0 %v391
    %1541 = vmatpush1.msra.mxu0 %v390
    %1542 = vmatprep.subr.mxu0 %v399
    %1543 = vmatpush1.msra.mxu0 %v398
    %1544 = vmatprep.mubr.f32.mxu0 %v117
    %1545 = vmatmul.mubr.f32.gmra.mrb[0].mxu0 %v116
    %v1546 = vpop.f32.mrb[0].mxu0
    %v1547 = vadd.f32 0.0, %v1546
    %v1548 = vpop.f32.mrb[0].mxu0
    %v1549 = vadd.f32 0.0, %v1548
    %1550 = vmatprep.mubr.f32.mxu0 %v125
    %1551 = vmatmul.mubr.f32.gmra.mrb[0].mxu0 %v124
    %v1552 = vpop.f32.mrb[0].mxu0
    %v1553 = vadd.f32 0.0, %v1552
    %v1554 = vpop.f32.mrb[0].mxu0
    %v1555 = vadd.f32 0.0, %v1554
    %1556 = vdwg.mxu0
    %1557 = vmatprep.subr.mxu0 %v407
    %1558 = vmatpush1.msra.mxu0 %v406
    %1559 = vmatprep.subr.mxu0 %v415
    %1560 = vmatpush1.msra.mxu0 %v414
    %1561 = vmatprep.subr.mxu0 %v423
    %1562 = vmatpush1.msra.mxu0 %v422
    %1563 = vmatprep.subr.mxu0 %v431
    %1564 = vmatpush1.msra.mxu0 %v430
    %1565 = vmatprep.subr.mxu0 %v439
    %1566 = vmatpush1.msra.mxu0 %v438
    %1567 = vmatprep.subr.mxu0 %v447
    %1568 = vmatpush1.msra.mxu0 %v446
    %1569 = vmatprep.subr.mxu0 %v455
    %1570 = vmatpush1.msra.mxu0 %v454
    %1571 = vmatprep.subr.mxu0 %v463
    %1572 = vmatpush1.msra.mxu0 %v462
    %1573 = vmatprep.subr.mxu0 %v471
    %1574 = vmatpush1.msra.mxu0 %v470
    %1575 = vmatprep.subr.mxu0 %v479
    %1576 = vmatpush1.msra.mxu0 %v478
    %1577 = vmatprep.subr.mxu0 %v487
    %1578 = vmatpush1.msra.mxu0 %v486
    %1579 = vmatprep.subr.mxu0 %v495
    %1580 = vmatpush1.msra.mxu0 %v494
    %1581 = vmatprep.subr.mxu0 %v503
    %1582 = vmatpush1.msra.mxu0 %v502
    %1583 = vmatprep.subr.mxu0 %v511
    %1584 = vmatpush1.msra.mxu0 %v510
    %1585 = vmatprep.subr.mxu0 %v519
    %1586 = vmatpush1.msra.mxu0 %v518
    %1587 = vmatprep.subr.mxu0 %v527
    %1588 = vmatpush1.msra.mxu0 %v526
    %1589 = vmatprep.subr.mxu0 %v535
    %1590 = vmatpush1.msra.mxu0 %v534
    %1591 = vmatprep.subr.mxu0 %v543
    %1592 = vmatpush1.msra.mxu0 %v542
    %1593 = vmatprep.subr.mxu0 %v551
    %1594 = vmatpush1.msra.mxu0 %v550
    %1595 = vmatprep.subr.mxu0 %v559
    %1596 = vmatpush1.msra.mxu0 %v558
    %1597 = vmatprep.subr.mxu0 %v567
    %1598 = vmatpush1.msra.mxu0 %v566
    %1599 = vmatprep.subr.mxu0 %v575
    %1600 = vmatpush1.msra.mxu0 %v574
    %1601 = vmatprep.subr.mxu0 %v583
    %1602 = vmatpush1.msra.mxu0 %v582
    %1603 = vmatprep.subr.mxu0 %v591
    %1604 = vmatpush1.msra.mxu0 %v590
    %1605 = vmatprep.subr.mxu0 %v599
    %1606 = vmatpush1.msra.mxu0 %v598
    %1607 = vmatprep.subr.mxu0 %v607
    %1608 = vmatpush1.msra.mxu0 %v606
    %1609 = vmatprep.subr.mxu0 %v615
    %1610 = vmatpush1.msra.mxu0 %v614
    %1611 = vmatprep.subr.mxu0 %v623
    %1612 = vmatpush1.msra.mxu0 %v622
    %1613 = vmatprep.subr.mxu0 %v631
    %1614 = vmatpush1.msra.mxu0 %v630
    %1615 = vmatprep.subr.mxu0 %v639
    %1616 = vmatpush1.msra.mxu0 %v638
    %1617 = vmatprep.subr.mxu0 %v647
    %1618 = vmatpush1.msra.mxu0 %v646
    %1619 = vmatprep.subr.mxu0 %v655
    %1620 = vmatpush1.msra.mxu0 %v654
    %1621 = vmatprep.mubr.f32.mxu0 %v119
    %1622 = vmatmul.mubr.f32.gmra.mrb[0].mxu0 %v118
    %v1623 = vpop.f32.mrb[0].mxu0
    %v1624 = vadd.f32 %v1547, %v1623
    %v1625 = vpop.f32.mrb[0].mxu0
    %v1626 = vadd.f32 %v1549, %v1625
    %1627 = vmatprep.mubr.f32.mxu0 %v127
    %1628 = vmatmul.mubr.f32.gmra.mrb[0].mxu0 %v126
    %v1629 = vpop.f32.mrb[0].mxu0
    %v1630 = vadd.f32 %v1553, %v1629
    %v1631 = vpop.f32.mrb[0].mxu0
    %v1632 = vadd.f32 %v1555, %v1631
    %1633 = vdwg.mxu0
    %1634 = vmatprep.subr.mxu0 %v663
    %1635 = vmatpush1.msra.mxu0 %v662
    %1636 = vmatprep.subr.mxu0 %v671
    %1637 = vmatpush1.msra.mxu0 %v670
    %1638 = vmatprep.subr.mxu0 %v679
    %1639 = vmatpush1.msra.mxu0 %v678
    %1640 = vmatprep.subr.mxu0 %v687
    %1641 = vmatpush1.msra.mxu0 %v686
    %1642 = vmatprep.subr.mxu0 %v695
    %1643 = vmatpush1.msra.mxu0 %v694
    %1644 = vmatprep.subr.mxu0 %v703
    %1645 = vmatpush1.msra.mxu0 %v702
    %1646 = vmatprep.subr.mxu0 %v711
    %1647 = vmatpush1.msra.mxu0 %v710
    %1648 = vmatprep.subr.mxu0 %v719
    %1649 = vmatpush1.msra.mxu0 %v718
    %1650 = vmatprep.subr.mxu0 %v727
    %1651 = vmatpush1.msra.mxu0 %v726
    %1652 = vmatprep.subr.mxu0 %v735
    %1653 = vmatpush1.msra.mxu0 %v734
    %1654 = vmatprep.subr.mxu0 %v743
    %1655 = vmatpush1.msra.mxu0 %v742
    %1656 = vmatprep.subr.mxu0 %v751
    %1657 = vmatpush1.msra.mxu0 %v750
    %1658 = vmatprep.subr.mxu0 %v759
    %1659 = vmatpush1.msra.mxu0 %v758
    %1660 = vmatprep.subr.mxu0 %v767
    %1661 = vmatpush1.msra.mxu0 %v766
    %1662 = vmatprep.subr.mxu0 %v775
    %1663 = vmatpush1.msra.mxu0 %v774
    %1664 = vmatprep.subr.mxu0 %v783
    %1665 = vmatpush1.msra.mxu0 %v782
    %1666 = vmatprep.subr.mxu0 %v791
    %1667 = vmatpush1.msra.mxu0 %v790
    %1668 = vmatprep.subr.mxu0 %v799
    %1669 = vmatpush1.msra.mxu0 %v798
    %1670 = vmatprep.subr.mxu0 %v807
    %1671 = vmatpush1.msra.mxu0 %v806
    %1672 = vmatprep.subr.mxu0 %v815
    %1673 = vmatpush1.msra.mxu0 %v814
    %1674 = vmatprep.subr.mxu0 %v823
    %1675 = vmatpush1.msra.mxu0 %v822
    %1676 = vmatprep.subr.mxu0 %v831
    %1677 = vmatpush1.msra.mxu0 %v830
    %1678 = vmatprep.subr.mxu0 %v839
    %1679 = vmatpush1.msra.mxu0 %v838
    %1680 = vmatprep.subr.mxu0 %v847
    %1681 = vmatpush1.msra.mxu0 %v846
    %1682 = vmatprep.subr.mxu0 %v855
    %1683 = vmatpush1.msra.mxu0 %v854
    %1684 = vmatprep.subr.mxu0 %v863
    %1685 = vmatpush1.msra.mxu0 %v862
    %1686 = vmatprep.subr.mxu0 %v871
    %1687 = vmatpush1.msra.mxu0 %v870
    %1688 = vmatprep.subr.mxu0 %v879
    %1689 = vmatpush1.msra.mxu0 %v878
    %1690 = vmatprep.subr.mxu0 %v887
    %1691 = vmatpush1.msra.mxu0 %v886
    %1692 = vmatprep.subr.mxu0 %v895
    %1693 = vmatpush1.msra.mxu0 %v894
    %1694 = vmatprep.subr.mxu0 %v903
    %1695 = vmatpush1.msra.mxu0 %v902
    %1696 = vmatprep.subr.mxu0 %v911
    %1697 = vmatpush1.msra.mxu0 %v910
    %1698 = vmatprep.mubr.f32.mxu0 %v121
    %1699 = vmatmul.mubr.f32.gmra.mrb[0].mxu0 %v120
    %v1700 = vpop.f32.mrb[0].mxu0
    %v1701 = vadd.f32 %v1624, %v1700
    %v1702 = vpop.f32.mrb[0].mxu0
    %v1703 = vadd.f32 %v1626, %v1702
    %1704 = vmatprep.mubr.f32.mxu0 %v129
    %1705 = vmatmul.mubr.f32.gmra.mrb[0].mxu0 %v128
    %v1706 = vpop.f32.mrb[0].mxu0
    %v1707 = vadd.f32 %v1630, %v1706
    %v1708 = vpop.f32.mrb[0].mxu0
    %v1709 = vadd.f32 %v1632, %v1708
    %1710 = vdwg.mxu0
    %1711 = vmatprep.subr.mxu0 %v919
    %1712 = vmatpush1.msra.mxu0 %v918
    %1713 = vmatprep.subr.mxu0 %v927
    %1714 = vmatpush1.msra.mxu0 %v926
    %1715 = vmatprep.subr.mxu0 %v935
    %1716 = vmatpush1.msra.mxu0 %v934
    %1717 = vmatprep.subr.mxu0 %v943
    %1718 = vmatpush1.msra.mxu0 %v942
    %1719 = vmatprep.subr.mxu0 %v951
    %1720 = vmatpush1.msra.mxu0 %v950
    %1721 = vmatprep.subr.mxu0 %v959
    %1722 = vmatpush1.msra.mxu0 %v958
    %1723 = vmatprep.subr.mxu0 %v967
    %1724 = vmatpush1.msra.mxu0 %v966
    %1725 = vmatprep.subr.mxu0 %v975
    %1726 = vmatpush1.msra.mxu0 %v974
    %1727 = vmatprep.subr.mxu0 %v983
    %1728 = vmatpush1.msra.mxu0 %v982
    %1729 = vmatprep.subr.mxu0 %v991
    %1730 = vmatpush1.msra.mxu0 %v990
    %1731 = vmatprep.subr.mxu0 %v999
    %1732 = vmatpush1.msra.mxu0 %v998
    %1733 = vmatprep.subr.mxu0 %v1007
    %1734 = vmatpush1.msra.mxu0 %v1006
    %1735 = vmatprep.subr.mxu0 %v1015
    %1736 = vmatpush1.msra.mxu0 %v1014
    %1737 = vmatprep.subr.mxu0 %v1023
    %1738 = vmatpush1.msra.mxu0 %v1022
    %1739 = vmatprep.subr.mxu0 %v1031
    %1740 = vmatpush1.msra.mxu0 %v1030
    %1741 = vmatprep.subr.mxu0 %v1039
    %1742 = vmatpush1.msra.mxu0 %v1038
    %1743 = vmatprep.subr.mxu0 %v1047
    %1744 = vmatpush1.msra.mxu0 %v1046
    %1745 = vmatprep.subr.mxu0 %v1055
    %1746 = vmatpush1.msra.mxu0 %v1054
    %1747 = vmatprep.subr.mxu0 %v1063
    %1748 = vmatpush1.msra.mxu0 %v1062
    %1749 = vmatprep.subr.mxu0 %v1071
    %1750 = vmatpush1.msra.mxu0 %v1070
    %1751 = vmatprep.subr.mxu0 %v1079
    %1752 = vmatpush1.msra.mxu0 %v1078
    %1753 = vmatprep.subr.mxu0 %v1087
    %1754 = vmatpush1.msra.mxu0 %v1086
    %1755 = vmatprep.subr.mxu0 %v1095
    %1756 = vmatpush1.msra.mxu0 %v1094
    %1757 = vmatprep.subr.mxu0 %v1103
    %1758 = vmatpush1.msra.mxu0 %v1102
    %1759 = vmatprep.subr.mxu0 %v1111
    %1760 = vmatpush1.msra.mxu0 %v1110
    %1761 = vmatprep.subr.mxu0 %v1119
    %1762 = vmatpush1.msra.mxu0 %v1118
    %1763 = vmatprep.subr.mxu0 %v1127
    %1764 = vmatpush1.msra.mxu0 %v1126
    %1765 = vmatprep.subr.mxu0 %v1135
    %1766 = vmatpush1.msra.mxu0 %v1134
    %1767 = vmatprep.subr.mxu0 %v1143
    %1768 = vmatpush1.msra.mxu0 %v1142
    %1769 = vmatprep.subr.mxu0 %v1151
    %1770 = vmatpush1.msra.mxu0 %v1150
    %1771 = vmatprep.subr.mxu0 %v1159
    %1772 = vmatpush1.msra.mxu0 %v1158
    %1773 = vmatprep.subr.mxu0 %v1167
    %1774 = vmatpush1.msra.mxu0 %v1166
    %1775 = vmatprep.mubr.f32.mxu0 %v123
    %1776 = vmatmul.mubr.f32.gmra.mrb[0].mxu0 %v122
    %v1777 = vpop.f32.mrb[0].mxu0
    %v1778 = vadd.f32 %v1701, %v1777
    %v1779 = vpop.f32.mrb[0].mxu0
    %v1780 = vadd.f32 %v1703, %v1779
    %1781 = vmatprep.mubr.f32.mxu0 %v131
    %1782 = vmatmul.mubr.f32.gmra.mrb[0].mxu0 %v130
    %v1783 = vpop.f32.mrb[0].mxu0
    %v1784 = vadd.f32 %v1707, %v1783
    %v1785 = vpop.f32.mrb[0].mxu0
    %v1786 = vadd.f32 %v1709, %v1785
    %1787 = vdwg.mxu0
    %1788 = vmatprep.subr.mxu0 %v153
    %1789 = vmatpush1.msra.mxu0 %v152
    %1790 = vmatprep.subr.mxu0 %v161
    %1791 = vmatpush1.msra.mxu0 %v160
    %1792 = vmatprep.subr.mxu0 %v169
    %1793 = vmatpush1.msra.mxu0 %v168
    %1794 = vmatprep.subr.mxu0 %v177
    %1795 = vmatpush1.msra.mxu0 %v176
    %1796 = vmatprep.subr.mxu0 %v185
    %1797 = vmatpush1.msra.mxu0 %v184
    %1798 = vmatprep.subr.mxu0 %v193
    %1799 = vmatpush1.msra.mxu0 %v192
    %1800 = vmatprep.subr.mxu0 %v201
    %1801 = vmatpush1.msra.mxu0 %v200
    %1802 = vmatprep.subr.mxu0 %v209
    %1803 = vmatpush1.msra.mxu0 %v208
    %1804 = vmatprep.subr.mxu0 %v217
    %1805 = vmatpush1.msra.mxu0 %v216
    %1806 = vmatprep.subr.mxu0 %v225
    %1807 = vmatpush1.msra.mxu0 %v224
    %1808 = vmatprep.subr.mxu0 %v233
    %1809 = vmatpush1.msra.mxu0 %v232
    %1810 = vmatprep.subr.mxu0 %v241
    %1811 = vmatpush1.msra.mxu0 %v240
    %1812 = vmatprep.subr.mxu0 %v249
    %1813 = vmatpush1.msra.mxu0 %v248
    %1814 = vmatprep.subr.mxu0 %v257
    %1815 = vmatpush1.msra.mxu0 %v256
    %1816 = vmatprep.subr.mxu0 %v265
    %1817 = vmatpush1.msra.mxu0 %v264
    %1818 = vmatprep.subr.mxu0 %v273
    %1819 = vmatpush1.msra.mxu0 %v272
    %1820 = vmatprep.subr.mxu0 %v281
    %1821 = vmatpush1.msra.mxu0 %v280
    %1822 = vmatprep.subr.mxu0 %v289
    %1823 = vmatpush1.msra.mxu0 %v288
    %1824 = vmatprep.subr.mxu0 %v297
    %1825 = vmatpush1.msra.mxu0 %v296
    %1826 = vmatprep.subr.mxu0 %v305
    %1827 = vmatpush1.msra.mxu0 %v304
    %1828 = vmatprep.subr.mxu0 %v313
    %1829 = vmatpush1.msra.mxu0 %v312
    %1830 = vmatprep.subr.mxu0 %v321
    %1831 = vmatpush1.msra.mxu0 %v320
    %1832 = vmatprep.subr.mxu0 %v329
    %1833 = vmatpush1.msra.mxu0 %v328
    %1834 = vmatprep.subr.mxu0 %v337
    %1835 = vmatpush1.msra.mxu0 %v336
    %1836 = vmatprep.subr.mxu0 %v345
    %1837 = vmatpush1.msra.mxu0 %v344
    %1838 = vmatprep.subr.mxu0 %v353
    %1839 = vmatpush1.msra.mxu0 %v352
    %1840 = vmatprep.subr.mxu0 %v361
    %1841 = vmatpush1.msra.mxu0 %v360
    %1842 = vmatprep.subr.mxu0 %v369
    %1843 = vmatpush1.msra.mxu0 %v368
    %1844 = vmatprep.subr.mxu0 %v377
    %1845 = vmatpush1.msra.mxu0 %v376
    %1846 = vmatprep.subr.mxu0 %v385
    %1847 = vmatpush1.msra.mxu0 %v384
    %1848 = vmatprep.subr.mxu0 %v393
    %1849 = vmatpush1.msra.mxu0 %v392
    %1850 = vmatprep.subr.mxu0 %v401
    %1851 = vmatpush1.msra.mxu0 %v400
    %1852 = vmatprep.mubr.f32.mxu0 %v117
    %1853 = vmatmul.mubr.f32.gmra.mrb[0].mxu0 %v116
    %v1854 = vpop.f32.mrb[0].mxu0
    %v1855 = vadd.f32 0.0, %v1854
    %v1856 = vpop.f32.mrb[0].mxu0
    %v1857 = vadd.f32 0.0, %v1856
    %1858 = vmatprep.mubr.f32.mxu0 %v125
    %1859 = vmatmul.mubr.f32.gmra.mrb[0].mxu0 %v124
    %v1860 = vpop.f32.mrb[0].mxu0
    %v1861 = vadd.f32 0.0, %v1860
    %v1862 = vpop.f32.mrb[0].mxu0
    %v1863 = vadd.f32 0.0, %v1862
    %1864 = vdwg.mxu0
    %1865 = vmatprep.subr.mxu0 %v409
    %1866 = vmatpush1.msra.mxu0 %v408
    %1867 = vmatprep.subr.mxu0 %v417
    %1868 = vmatpush1.msra.mxu0 %v416
    %1869 = vmatprep.subr.mxu0 %v425
    %1870 = vmatpush1.msra.mxu0 %v424
    %1871 = vmatprep.subr.mxu0 %v433
    %1872 = vmatpush1.msra.mxu0 %v432
    %1873 = vmatprep.subr.mxu0 %v441
    %1874 = vmatpush1.msra.mxu0 %v440
    %1875 = vmatprep.subr.mxu0 %v449
    %1876 = vmatpush1.msra.mxu0 %v448
    %1877 = vmatprep.subr.mxu0 %v457
    %1878 = vmatpush1.msra.mxu0 %v456
    %1879 = vmatprep.subr.mxu0 %v465
    %1880 = vmatpush1.msra.mxu0 %v464
    %1881 = vmatprep.subr.mxu0 %v473
    %1882 = vmatpush1.msra.mxu0 %v472
    %1883 = vmatprep.subr.mxu0 %v481
    %1884 = vmatpush1.msra.mxu0 %v480
    %1885 = vmatprep.subr.mxu0 %v489
    %1886 = vmatpush1.msra.mxu0 %v488
    %1887 = vmatprep.subr.mxu0 %v497
    %1888 = vmatpush1.msra.mxu0 %v496
    %1889 = vmatprep.subr.mxu0 %v505
    %1890 = vmatpush1.msra.mxu0 %v504
    %1891 = vmatprep.subr.mxu0 %v513
    %1892 = vmatpush1.msra.mxu0 %v512
    %1893 = vmatprep.subr.mxu0 %v521
    %1894 = vmatpush1.msra.mxu0 %v520
    %1895 = vmatprep.subr.mxu0 %v529
    %1896 = vmatpush1.msra.mxu0 %v528
    %1897 = vmatprep.subr.mxu0 %v537
    %1898 = vmatpush1.msra.mxu0 %v536
    %1899 = vmatprep.subr.mxu0 %v545
    %1900 = vmatpush1.msra.mxu0 %v544
    %1901 = vmatprep.subr.mxu0 %v553
    %1902 = vmatpush1.msra.mxu0 %v552
    %1903 = vmatprep.subr.mxu0 %v561
    %1904 = vmatpush1.msra.mxu0 %v560
    %1905 = vmatprep.subr.mxu0 %v569
    %1906 = vmatpush1.msra.mxu0 %v568
    %1907 = vmatprep.subr.mxu0 %v577
    %1908 = vmatpush1.msra.mxu0 %v576
    %1909 = vmatprep.subr.mxu0 %v585
    %1910 = vmatpush1.msra.mxu0 %v584
    %1911 = vmatprep.subr.mxu0 %v593
    %1912 = vmatpush1.msra.mxu0 %v592
    %1913 = vmatprep.subr.mxu0 %v601
    %1914 = vmatpush1.msra.mxu0 %v600
    %1915 = vmatprep.subr.mxu0 %v609
    %1916 = vmatpush1.msra.mxu0 %v608
    %1917 = vmatprep.subr.mxu0 %v617
    %1918 = vmatpush1.msra.mxu0 %v616
    %1919 = vmatprep.subr.mxu0 %v625
    %1920 = vmatpush1.msra.mxu0 %v624
    %1921 = vmatprep.subr.mxu0 %v633
    %1922 = vmatpush1.msra.mxu0 %v632
    %1923 = vmatprep.subr.mxu0 %v641
    %1924 = vmatpush1.msra.mxu0 %v640
    %1925 = vmatprep.subr.mxu0 %v649
    %1926 = vmatpush1.msra.mxu0 %v648
    %1927 = vmatprep.subr.mxu0 %v657
    %1928 = vmatpush1.msra.mxu0 %v656
    %1929 = vmatprep.mubr.f32.mxu0 %v119
    %1930 = vmatmul.mubr.f32.gmra.mrb[0].mxu0 %v118
    %v1931 = vpop.f32.mrb[0].mxu0
    %v1932 = vadd.f32 %v1855, %v1931
    %v1933 = vpop.f32.mrb[0].mxu0
    %v1934 = vadd.f32 %v1857, %v1933
    %1935 = vmatprep.mubr.f32.mxu0 %v127
    %1936 = vmatmul.mubr.f32.gmra.mrb[0].mxu0 %v126
    %v1937 = vpop.f32.mrb[0].mxu0
    %v1938 = vadd.f32 %v1861, %v1937
    %v1939 = vpop.f32.mrb[0].mxu0
    %v1940 = vadd.f32 %v1863, %v1939
    %1941 = vdwg.mxu0
    %1942 = vmatprep.subr.mxu0 %v665
    %1943 = vmatpush1.msra.mxu0 %v664
    %1944 = vmatprep.subr.mxu0 %v673
    %1945 = vmatpush1.msra.mxu0 %v672
    %1946 = vmatprep.subr.mxu0 %v681
    %1947 = vmatpush1.msra.mxu0 %v680
    %1948 = vmatprep.subr.mxu0 %v689
    %1949 = vmatpush1.msra.mxu0 %v688
    %1950 = vmatprep.subr.mxu0 %v697
    %1951 = vmatpush1.msra.mxu0 %v696
    %1952 = vmatprep.subr.mxu0 %v705
    %1953 = vmatpush1.msra.mxu0 %v704
    %1954 = vmatprep.subr.mxu0 %v713
    %1955 = vmatpush1.msra.mxu0 %v712
    %1956 = vmatprep.subr.mxu0 %v721
    %1957 = vmatpush1.msra.mxu0 %v720
    %1958 = vmatprep.subr.mxu0 %v729
    %1959 = vmatpush1.msra.mxu0 %v728
    %1960 = vmatprep.subr.mxu0 %v737
    %1961 = vmatpush1.msra.mxu0 %v736
    %1962 = vmatprep.subr.mxu0 %v745
    %1963 = vmatpush1.msra.mxu0 %v744
    %1964 = vmatprep.subr.mxu0 %v753
    %1965 = vmatpush1.msra.mxu0 %v752
    %1966 = vmatprep.subr.mxu0 %v761
    %1967 = vmatpush1.msra.mxu0 %v760
    %1968 = vmatprep.subr.mxu0 %v769
    %1969 = vmatpush1.msra.mxu0 %v768
    %1970 = vmatprep.subr.mxu0 %v777
    %1971 = vmatpush1.msra.mxu0 %v776
    %1972 = vmatprep.subr.mxu0 %v785
    %1973 = vmatpush1.msra.mxu0 %v784
    %1974 = vmatprep.subr.mxu0 %v793
    %1975 = vmatpush1.msra.mxu0 %v792
    %1976 = vmatprep.subr.mxu0 %v801
    %1977 = vmatpush1.msra.mxu0 %v800
    %1978 = vmatprep.subr.mxu0 %v809
    %1979 = vmatpush1.msra.mxu0 %v808
    %1980 = vmatprep.subr.mxu0 %v817
    %1981 = vmatpush1.msra.mxu0 %v816
    %1982 = vmatprep.subr.mxu0 %v825
    %1983 = vmatpush1.msra.mxu0 %v824
    %1984 = vmatprep.subr.mxu0 %v833
    %1985 = vmatpush1.msra.mxu0 %v832
    %1986 = vmatprep.subr.mxu0 %v841
    %1987 = vmatpush1.msra.mxu0 %v840
    %1988 = vmatprep.subr.mxu0 %v849
    %1989 = vmatpush1.msra.mxu0 %v848
    %1990 = vmatprep.subr.mxu0 %v857
    %1991 = vmatpush1.msra.mxu0 %v856
    %1992 = vmatprep.subr.mxu0 %v865
    %1993 = vmatpush1.msra.mxu0 %v864
    %1994 = vmatprep.subr.mxu0 %v873
    %1995 = vmatpush1.msra.mxu0 %v872
    %1996 = vmatprep.subr.mxu0 %v881
    %1997 = vmatpush1.msra.mxu0 %v880
    %1998 = vmatprep.subr.mxu0 %v889
    %1999 = vmatpush1.msra.mxu0 %v888
    %2000 = vmatprep.subr.mxu0 %v897
    %2001 = vmatpush1.msra.mxu0 %v896
    %2002 = vmatprep.subr.mxu0 %v905
    %2003 = vmatpush1.msra.mxu0 %v904
    %2004 = vmatprep.subr.mxu0 %v913
    %2005 = vmatpush1.msra.mxu0 %v912
    %2006 = vmatprep.mubr.f32.mxu0 %v121
    %2007 = vmatmul.mubr.f32.gmra.mrb[0].mxu0 %v120
    %v2008 = vpop.f32.mrb[0].mxu0
    %v2009 = vadd.f32 %v1932, %v2008
    %v2010 = vpop.f32.mrb[0].mxu0
    %v2011 = vadd.f32 %v1934, %v2010
    %2012 = vmatprep.mubr.f32.mxu0 %v129
    %2013 = vmatmul.mubr.f32.gmra.mrb[0].mxu0 %v128
    %v2014 = vpop.f32.mrb[0].mxu0
    %v2015 = vadd.f32 %v1938, %v2014
    %v2016 = vpop.f32.mrb[0].mxu0
    %v2017 = vadd.f32 %v1940, %v2016
    %2018 = vdwg.mxu0
    %2019 = vmatprep.subr.mxu0 %v921
    %2020 = vmatpush1.msra.mxu0 %v920
    %2021 = vmatprep.subr.mxu0 %v929
    %2022 = vmatpush1.msra.mxu0 %v928
    %2023 = vmatprep.subr.mxu0 %v937
    %2024 = vmatpush1.msra.mxu0 %v936
    %2025 = vmatprep.subr.mxu0 %v945
    %2026 = vmatpush1.msra.mxu0 %v944
    %2027 = vmatprep.subr.mxu0 %v953
    %2028 = vmatpush1.msra.mxu0 %v952
    %2029 = vmatprep.subr.mxu0 %v961
    %2030 = vmatpush1.msra.mxu0 %v960
    %2031 = vmatprep.subr.mxu0 %v969
    %2032 = vmatpush1.msra.mxu0 %v968
    %2033 = vmatprep.subr.mxu0 %v977
    %2034 = vmatpush1.msra.mxu0 %v976
    %2035 = vmatprep.subr.mxu0 %v985
    %2036 = vmatpush1.msra.mxu0 %v984
    %2037 = vmatprep.subr.mxu0 %v993
    %2038 = vmatpush1.msra.mxu0 %v992
    %2039 = vmatprep.subr.mxu0 %v1001
    %2040 = vmatpush1.msra.mxu0 %v1000
    %2041 = vmatprep.subr.mxu0 %v1009
    %2042 = vmatpush1.msra.mxu0 %v1008
    %2043 = vmatprep.subr.mxu0 %v1017
    %2044 = vmatpush1.msra.mxu0 %v1016
    %2045 = vmatprep.subr.mxu0 %v1025
    %2046 = vmatpush1.msra.mxu0 %v1024
    %2047 = vmatprep.subr.mxu0 %v1033
    %2048 = vmatpush1.msra.mxu0 %v1032
    %2049 = vmatprep.subr.mxu0 %v1041
    %2050 = vmatpush1.msra.mxu0 %v1040
    %2051 = vmatprep.subr.mxu0 %v1049
    %2052 = vmatpush1.msra.mxu0 %v1048
    %2053 = vmatprep.subr.mxu0 %v1057
    %2054 = vmatpush1.msra.mxu0 %v1056
    %2055 = vmatprep.subr.mxu0 %v1065
    %2056 = vmatpush1.msra.mxu0 %v1064
    %2057 = vmatprep.subr.mxu0 %v1073
    %2058 = vmatpush1.msra.mxu0 %v1072
    %2059 = vmatprep.subr.mxu0 %v1081
    %2060 = vmatpush1.msra.mxu0 %v1080
    %2061 = vmatprep.subr.mxu0 %v1089
    %2062 = vmatpush1.msra.mxu0 %v1088
    %2063 = vmatprep.subr.mxu0 %v1097
    %2064 = vmatpush1.msra.mxu0 %v1096
    %2065 = vmatprep.subr.mxu0 %v1105
    %2066 = vmatpush1.msra.mxu0 %v1104
    %2067 = vmatprep.subr.mxu0 %v1113
    %2068 = vmatpush1.msra.mxu0 %v1112
    %2069 = vmatprep.subr.mxu0 %v1121
    %2070 = vmatpush1.msra.mxu0 %v1120
    %2071 = vmatprep.subr.mxu0 %v1129
    %2072 = vmatpush1.msra.mxu0 %v1128
    %2073 = vmatprep.subr.mxu0 %v1137
    %2074 = vmatpush1.msra.mxu0 %v1136
    %2075 = vmatprep.subr.mxu0 %v1145
    %2076 = vmatpush1.msra.mxu0 %v1144
    %2077 = vmatprep.subr.mxu0 %v1153
    %2078 = vmatpush1.msra.mxu0 %v1152
    %2079 = vmatprep.subr.mxu0 %v1161
    %2080 = vmatpush1.msra.mxu0 %v1160
    %2081 = vmatprep.subr.mxu0 %v1169
    %2082 = vmatpush1.msra.mxu0 %v1168
    %2083 = vmatprep.mubr.f32.mxu0 %v123
    %2084 = vmatmul.mubr.f32.gmra.mrb[0].mxu0 %v122
    %v2085 = vpop.f32.mrb[0].mxu0
    %v2086 = vadd.f32 %v2009, %v2085
    %v2087 = vpop.f32.mrb[0].mxu0
    %v2088 = vadd.f32 %v2011, %v2087
    %2089 = vmatprep.mubr.f32.mxu0 %v131
    %2090 = vmatmul.mubr.f32.gmra.mrb[0].mxu0 %v130
    %v2091 = vpop.f32.mrb[0].mxu0
    %v2092 = vadd.f32 %v2015, %v2091
    %v2093 = vpop.f32.mrb[0].mxu0
    %v2094 = vadd.f32 %v2017, %v2093
    %2095 = vdwg.mxu0
    %2096 = vmatprep.subr.mxu0 %v155
    %2097 = vmatpush1.msra.mxu0 %v154
    %2098 = vmatprep.subr.mxu0 %v163
    %2099 = vmatpush1.msra.mxu0 %v162
    %2100 = vmatprep.subr.mxu0 %v171
    %2101 = vmatpush1.msra.mxu0 %v170
    %2102 = vmatprep.subr.mxu0 %v179
    %2103 = vmatpush1.msra.mxu0 %v178
    %2104 = vmatprep.subr.mxu0 %v187
    %2105 = vmatpush1.msra.mxu0 %v186
    %2106 = vmatprep.subr.mxu0 %v195
    %2107 = vmatpush1.msra.mxu0 %v194
    %2108 = vmatprep.subr.mxu0 %v203
    %2109 = vmatpush1.msra.mxu0 %v202
    %2110 = vmatprep.subr.mxu0 %v211
    %2111 = vmatpush1.msra.mxu0 %v210
    %2112 = vmatprep.subr.mxu0 %v219
    %2113 = vmatpush1.msra.mxu0 %v218
    %2114 = vmatprep.subr.mxu0 %v227
    %2115 = vmatpush1.msra.mxu0 %v226
    %2116 = vmatprep.subr.mxu0 %v235
    %2117 = vmatpush1.msra.mxu0 %v234
    %2118 = vmatprep.subr.mxu0 %v243
    %2119 = vmatpush1.msra.mxu0 %v242
    %2120 = vmatprep.subr.mxu0 %v251
    %2121 = vmatpush1.msra.mxu0 %v250
    %2122 = vmatprep.subr.mxu0 %v259
    %2123 = vmatpush1.msra.mxu0 %v258
    %2124 = vmatprep.subr.mxu0 %v267
    %2125 = vmatpush1.msra.mxu0 %v266
    %2126 = vmatprep.subr.mxu0 %v275
    %2127 = vmatpush1.msra.mxu0 %v274
    %2128 = vmatprep.subr.mxu0 %v283
    %2129 = vmatpush1.msra.mxu0 %v282
    %2130 = vmatprep.subr.mxu0 %v291
    %2131 = vmatpush1.msra.mxu0 %v290
    %2132 = vmatprep.subr.mxu0 %v299
    %2133 = vmatpush1.msra.mxu0 %v298
    %2134 = vmatprep.subr.mxu0 %v307
    %2135 = vmatpush1.msra.mxu0 %v306
    %2136 = vmatprep.subr.mxu0 %v315
    %2137 = vmatpush1.msra.mxu0 %v314
    %2138 = vmatprep.subr.mxu0 %v323
    %2139 = vmatpush1.msra.mxu0 %v322
    %2140 = vmatprep.subr.mxu0 %v331
    %2141 = vmatpush1.msra.mxu0 %v330
    %2142 = vmatprep.subr.mxu0 %v339
    %2143 = vmatpush1.msra.mxu0 %v338
    %2144 = vmatprep.subr.mxu0 %v347
    %2145 = vmatpush1.msra.mxu0 %v346
    %2146 = vmatprep.subr.mxu0 %v355
    %2147 = vmatpush1.msra.mxu0 %v354
    %2148 = vmatprep.subr.mxu0 %v363
    %2149 = vmatpush1.msra.mxu0 %v362
    %2150 = vmatprep.subr.mxu0 %v371
    %2151 = vmatpush1.msra.mxu0 %v370
    %2152 = vmatprep.subr.mxu0 %v379
    %2153 = vmatpush1.msra.mxu0 %v378
    %2154 = vmatprep.subr.mxu0 %v387
    %2155 = vmatpush1.msra.mxu0 %v386
    %2156 = vmatprep.subr.mxu0 %v395
    %2157 = vmatpush1.msra.mxu0 %v394
    %2158 = vmatprep.subr.mxu0 %v403
    %2159 = vmatpush1.msra.mxu0 %v402
    %2160 = vmatprep.mubr.f32.mxu0 %v117
    %2161 = vmatmul.mubr.f32.gmra.mrb[0].mxu0 %v116
    %v2162 = vpop.f32.mrb[0].mxu0
    %v2163 = vadd.f32 0.0, %v2162
    %v2164 = vpop.f32.mrb[0].mxu0
    %v2165 = vadd.f32 0.0, %v2164
    %2166 = vmatprep.mubr.f32.mxu0 %v125
    %2167 = vmatmul.mubr.f32.gmra.mrb[0].mxu0 %v124
    %v2168 = vpop.f32.mrb[0].mxu0
    %v2169 = vadd.f32 0.0, %v2168
    %v2170 = vpop.f32.mrb[0].mxu0
    %v2171 = vadd.f32 0.0, %v2170
    %2172 = vdwg.mxu0
    %2173 = vmatprep.subr.mxu0 %v411
    %2174 = vmatpush1.msra.mxu0 %v410
    %2175 = vmatprep.subr.mxu0 %v419
    %2176 = vmatpush1.msra.mxu0 %v418
    %2177 = vmatprep.subr.mxu0 %v427
    %2178 = vmatpush1.msra.mxu0 %v426
    %2179 = vmatprep.subr.mxu0 %v435
    %2180 = vmatpush1.msra.mxu0 %v434
    %2181 = vmatprep.subr.mxu0 %v443
    %2182 = vmatpush1.msra.mxu0 %v442
    %2183 = vmatprep.subr.mxu0 %v451
    %2184 = vmatpush1.msra.mxu0 %v450
    %2185 = vmatprep.subr.mxu0 %v459
    %2186 = vmatpush1.msra.mxu0 %v458
    %2187 = vmatprep.subr.mxu0 %v467
    %2188 = vmatpush1.msra.mxu0 %v466
    %2189 = vmatprep.subr.mxu0 %v475
    %2190 = vmatpush1.msra.mxu0 %v474
    %2191 = vmatprep.subr.mxu0 %v483
    %2192 = vmatpush1.msra.mxu0 %v482
    %2193 = vmatprep.subr.mxu0 %v491
    %2194 = vmatpush1.msra.mxu0 %v490
    %2195 = vmatprep.subr.mxu0 %v499
    %2196 = vmatpush1.msra.mxu0 %v498
    %2197 = vmatprep.subr.mxu0 %v507
    %2198 = vmatpush1.msra.mxu0 %v506
    %2199 = vmatprep.subr.mxu0 %v515
    %2200 = vmatpush1.msra.mxu0 %v514
    %2201 = vmatprep.subr.mxu0 %v523
    %2202 = vmatpush1.msra.mxu0 %v522
    %2203 = vmatprep.subr.mxu0 %v531
    %2204 = vmatpush1.msra.mxu0 %v530
    %2205 = vmatprep.subr.mxu0 %v539
    %2206 = vmatpush1.msra.mxu0 %v538
    %2207 = vmatprep.subr.mxu0 %v547
    %2208 = vmatpush1.msra.mxu0 %v546
    %2209 = vmatprep.subr.mxu0 %v555
    %2210 = vmatpush1.msra.mxu0 %v554
    %2211 = vmatprep.subr.mxu0 %v563
    %2212 = vmatpush1.msra.mxu0 %v562
    %2213 = vmatprep.subr.mxu0 %v571
    %2214 = vmatpush1.msra.mxu0 %v570
    %2215 = vmatprep.subr.mxu0 %v579
    %2216 = vmatpush1.msra.mxu0 %v578
    %2217 = vmatprep.subr.mxu0 %v587
    %2218 = vmatpush1.msra.mxu0 %v586
    %2219 = vmatprep.subr.mxu0 %v595
    %2220 = vmatpush1.msra.mxu0 %v594
    %2221 = vmatprep.subr.mxu0 %v603
    %2222 = vmatpush1.msra.mxu0 %v602
    %2223 = vmatprep.subr.mxu0 %v611
    %2224 = vmatpush1.msra.mxu0 %v610
    %2225 = vmatprep.subr.mxu0 %v619
    %2226 = vmatpush1.msra.mxu0 %v618
    %2227 = vmatprep.subr.mxu0 %v627
    %2228 = vmatpush1.msra.mxu0 %v626
    %2229 = vmatprep.subr.mxu0 %v635
    %2230 = vmatpush1.msra.mxu0 %v634
    %2231 = vmatprep.subr.mxu0 %v643
    %2232 = vmatpush1.msra.mxu0 %v642
    %2233 = vmatprep.subr.mxu0 %v651
    %2234 = vmatpush1.msra.mxu0 %v650
    %2235 = vmatprep.subr.mxu0 %v659
    %2236 = vmatpush1.msra.mxu0 %v658
    %2237 = vmatprep.mubr.f32.mxu0 %v119
    %2238 = vmatmul.mubr.f32.gmra.mrb[0].mxu0 %v118
    %v2239 = vpop.f32.mrb[0].mxu0
    %v2240 = vadd.f32 %v2163, %v2239
    %v2241 = vpop.f32.mrb[0].mxu0
    %v2242 = vadd.f32 %v2165, %v2241
    %2243 = vmatprep.mubr.f32.mxu0 %v127
    %2244 = vmatmul.mubr.f32.gmra.mrb[0].mxu0 %v126
    %v2245 = vpop.f32.mrb[0].mxu0
    %v2246 = vadd.f32 %v2169, %v2245
    %v2247 = vpop.f32.mrb[0].mxu0
    %v2248 = vadd.f32 %v2171, %v2247
    %2249 = vdwg.mxu0
    %2250 = vmatprep.subr.mxu0 %v667
    %2251 = vmatpush1.msra.mxu0 %v666
    %2252 = vmatprep.subr.mxu0 %v675
    %2253 = vmatpush1.msra.mxu0 %v674
    %2254 = vmatprep.subr.mxu0 %v683
    %2255 = vmatpush1.msra.mxu0 %v682
    %2256 = vmatprep.subr.mxu0 %v691
    %2257 = vmatpush1.msra.mxu0 %v690
    %2258 = vmatprep.subr.mxu0 %v699
    %2259 = vmatpush1.msra.mxu0 %v698
    %2260 = vmatprep.subr.mxu0 %v707
    %2261 = vmatpush1.msra.mxu0 %v706
    %2262 = vmatprep.subr.mxu0 %v715
    %2263 = vmatpush1.msra.mxu0 %v714
    %2264 = vmatprep.subr.mxu0 %v723
    %2265 = vmatpush1.msra.mxu0 %v722
    %2266 = vmatprep.subr.mxu0 %v731
    %2267 = vmatpush1.msra.mxu0 %v730
    %2268 = vmatprep.subr.mxu0 %v739
    %2269 = vmatpush1.msra.mxu0 %v738
    %2270 = vmatprep.subr.mxu0 %v747
    %2271 = vmatpush1.msra.mxu0 %v746
    %2272 = vmatprep.subr.mxu0 %v755
    %2273 = vmatpush1.msra.mxu0 %v754
    %2274 = vmatprep.subr.mxu0 %v763
    %2275 = vmatpush1.msra.mxu0 %v762
    %2276 = vmatprep.subr.mxu0 %v771
    %2277 = vmatpush1.msra.mxu0 %v770
    %2278 = vmatprep.subr.mxu0 %v779
    %2279 = vmatpush1.msra.mxu0 %v778
    %2280 = vmatprep.subr.mxu0 %v787
    %2281 = vmatpush1.msra.mxu0 %v786
    %2282 = vmatprep.subr.mxu0 %v795
    %2283 = vmatpush1.msra.mxu0 %v794
    %2284 = vmatprep.subr.mxu0 %v803
    %2285 = vmatpush1.msra.mxu0 %v802
    %2286 = vmatprep.subr.mxu0 %v811
    %2287 = vmatpush1.msra.mxu0 %v810
    %2288 = vmatprep.subr.mxu0 %v819
    %2289 = vmatpush1.msra.mxu0 %v818
    %2290 = vmatprep.subr.mxu0 %v827
    %2291 = vmatpush1.msra.mxu0 %v826
    %2292 = vmatprep.subr.mxu0 %v835
    %2293 = vmatpush1.msra.mxu0 %v834
    %2294 = vmatprep.subr.mxu0 %v843
    %2295 = vmatpush1.msra.mxu0 %v842
    %2296 = vmatprep.subr.mxu0 %v851
    %2297 = vmatpush1.msra.mxu0 %v850
    %2298 = vmatprep.subr.mxu0 %v859
    %2299 = vmatpush1.msra.mxu0 %v858
    %2300 = vmatprep.subr.mxu0 %v867
    %2301 = vmatpush1.msra.mxu0 %v866
    %2302 = vmatprep.subr.mxu0 %v875
    %2303 = vmatpush1.msra.mxu0 %v874
    %2304 = vmatprep.subr.mxu0 %v883
    %2305 = vmatpush1.msra.mxu0 %v882
    %2306 = vmatprep.subr.mxu0 %v891
    %2307 = vmatpush1.msra.mxu0 %v890
    %2308 = vmatprep.subr.mxu0 %v899
    %2309 = vmatpush1.msra.mxu0 %v898
    %2310 = vmatprep.subr.mxu0 %v907
    %2311 = vmatpush1.msra.mxu0 %v906
    %2312 = vmatprep.subr.mxu0 %v915
    %2313 = vmatpush1.msra.mxu0 %v914
    %2314 = vmatprep.mubr.f32.mxu0 %v121
    %2315 = vmatmul.mubr.f32.gmra.mrb[0].mxu0 %v120
    %v2316 = vpop.f32.mrb[0].mxu0
    %v2317 = vadd.f32 %v2240, %v2316
    %v2318 = vpop.f32.mrb[0].mxu0
    %v2319 = vadd.f32 %v2242, %v2318
    %2320 = vmatprep.mubr.f32.mxu0 %v129
    %2321 = vmatmul.mubr.f32.gmra.mrb[0].mxu0 %v128
    %v2322 = vpop.f32.mrb[0].mxu0
    %v2323 = vadd.f32 %v2246, %v2322
    %v2324 = vpop.f32.mrb[0].mxu0
    %v2325 = vadd.f32 %v2248, %v2324
    %2326 = vdwg.mxu0
    %2327 = vmatprep.subr.mxu0 %v923
    %2328 = vmatpush1.msra.mxu0 %v922
    %2329 = vmatprep.subr.mxu0 %v931
    %2330 = vmatpush1.msra.mxu0 %v930
    %2331 = vmatprep.subr.mxu0 %v939
    %2332 = vmatpush1.msra.mxu0 %v938
    %2333 = vmatprep.subr.mxu0 %v947
    %2334 = vmatpush1.msra.mxu0 %v946
    %2335 = vmatprep.subr.mxu0 %v955
    %2336 = vmatpush1.msra.mxu0 %v954
    %2337 = vmatprep.subr.mxu0 %v963
    %2338 = vmatpush1.msra.mxu0 %v962
    %2339 = vmatprep.subr.mxu0 %v971
    %2340 = vmatpush1.msra.mxu0 %v970
    %2341 = vmatprep.subr.mxu0 %v979
    %2342 = vmatpush1.msra.mxu0 %v978
    %2343 = vmatprep.subr.mxu0 %v987
    %2344 = vmatpush1.msra.mxu0 %v986
    %2345 = vmatprep.subr.mxu0 %v995
    %2346 = vmatpush1.msra.mxu0 %v994
    %2347 = vmatprep.subr.mxu0 %v1003
    %2348 = vmatpush1.msra.mxu0 %v1002
    %2349 = vmatprep.subr.mxu0 %v1011
    %2350 = vmatpush1.msra.mxu0 %v1010
    %2351 = vmatprep.subr.mxu0 %v1019
    %2352 = vmatpush1.msra.mxu0 %v1018
    %2353 = vmatprep.subr.mxu0 %v1027
    %2354 = vmatpush1.msra.mxu0 %v1026
    %2355 = vmatprep.subr.mxu0 %v1035
    %2356 = vmatpush1.msra.mxu0 %v1034
    %2357 = vmatprep.subr.mxu0 %v1043
    %2358 = vmatpush1.msra.mxu0 %v1042
    %2359 = vmatprep.subr.mxu0 %v1051
    %2360 = vmatpush1.msra.mxu0 %v1050
    %2361 = vmatprep.subr.mxu0 %v1059
    %2362 = vmatpush1.msra.mxu0 %v1058
    %2363 = vmatprep.subr.mxu0 %v1067
    %2364 = vmatpush1.msra.mxu0 %v1066
    %2365 = vmatprep.subr.mxu0 %v1075
    %2366 = vmatpush1.msra.mxu0 %v1074
    %2367 = vmatprep.subr.mxu0 %v1083
    %2368 = vmatpush1.msra.mxu0 %v1082
    %2369 = vmatprep.subr.mxu0 %v1091
    %2370 = vmatpush1.msra.mxu0 %v1090
    %2371 = vmatprep.subr.mxu0 %v1099
    %2372 = vmatpush1.msra.mxu0 %v1098
    %2373 = vmatprep.subr.mxu0 %v1107
    %2374 = vmatpush1.msra.mxu0 %v1106
    %2375 = vmatprep.subr.mxu0 %v1115
    %2376 = vmatpush1.msra.mxu0 %v1114
    %2377 = vmatprep.subr.mxu0 %v1123
    %2378 = vmatpush1.msra.mxu0 %v1122
    %2379 = vmatprep.subr.mxu0 %v1131
    %2380 = vmatpush1.msra.mxu0 %v1130
    %2381 = vmatprep.subr.mxu0 %v1139
    %2382 = vmatpush1.msra.mxu0 %v1138
    %2383 = vmatprep.subr.mxu0 %v1147
    %2384 = vmatpush1.msra.mxu0 %v1146
    %2385 = vmatprep.subr.mxu0 %v1155
    %2386 = vmatpush1.msra.mxu0 %v1154
    %2387 = vmatprep.subr.mxu0 %v1163
    %2388 = vmatpush1.msra.mxu0 %v1162
    %2389 = vmatprep.subr.mxu0 %v1171
    %2390 = vmatpush1.msra.mxu0 %v1170
    %2391 = vmatprep.mubr.f32.mxu0 %v123
    %2392 = vmatmul.mubr.f32.gmra.mrb[0].mxu0 %v122
    %v2393 = vpop.f32.mrb[0].mxu0
    %v2394 = vadd.f32 %v2317, %v2393
    %v2395 = vpop.f32.mrb[0].mxu0
    %v2396 = vadd.f32 %v2319, %v2395
    %2397 = vmatprep.mubr.f32.mxu0 %v131
    %2398 = vmatmul.mubr.f32.gmra.mrb[0].mxu0 %v130
    %v2399 = vpop.f32.mrb[0].mxu0
    %v2400 = vadd.f32 %v2323, %v2399
    %v2401 = vpop.f32.mrb[0].mxu0
    %v2402 = vadd.f32 %v2325, %v2401
    %2403 = vdwg.mxu0
    %v2404 = vadd.f32 %v132, %v1470
    %v2405 = vadd.f32 %v133, %v1472
    %v2406 = vadd.f32 %v134, %v1778
    %v2407 = vadd.f32 %v135, %v1780
    %v2408 = vadd.f32 %v136, %v2086
    %v2409 = vadd.f32 %v137, %v2088
    %v2410 = vadd.f32 %v138, %v2394
    %v2411 = vadd.f32 %v139, %v2396
    %v2412 = vadd.f32 %v140, %v1476
    %v2413 = vadd.f32 %v141, %v1478
    %v2414 = vadd.f32 %v142, %v1784
    %v2415 = vadd.f32 %v143, %v1786
    %v2416 = vadd.f32 %v144, %v2092
    %v2417 = vadd.f32 %v145, %v2094
    %v2418 = vadd.f32 %v146, %v2400
    %v2419 = vadd.f32 %v147, %v2402
    %2420 = vst [vmem:[#allocation2] sm:$0xff] %v2404
    %2421 = vst [vmem:[#allocation2 + $0x8] sm:$0xff] %v2405
    %2422 = vst [vmem:[#allocation2 + $0x10] sm:$0xff] %v2406
    %2423 = vst [vmem:[#allocation2 + $0x18] sm:$0xff] %v2407
    %2424 = vst [vmem:[#allocation2 + $0x20] sm:$0xff] %v2408
    %2425 = vst [vmem:[#allocation2 + $0x28] sm:$0xff] %v2409
    %2426 = vst [vmem:[#allocation2 + $0x30] sm:$0xff] %v2410
    %2427 = vst [vmem:[#allocation2 + $0x38] sm:$0xff] %v2411
    %2428 = vst [vmem:[#allocation2 + $0x40] sm:$0xff] %v2412
    %2429 = vst [vmem:[#allocation2 + $0x48] sm:$0xff] %v2413
    %2430 = vst [vmem:[#allocation2 + $0x50] sm:$0xff] %v2414
    %2431 = vst [vmem:[#allocation2 + $0x58] sm:$0xff] %v2415
    %2432 = vst [vmem:[#allocation2 + $0x60] sm:$0xff] %v2416
    %2433 = vst [vmem:[#allocation2 + $0x68] sm:$0xff] %v2417
    %2434 = vst [vmem:[#allocation2 + $0x70] sm:$0xff] %v2418
    %2435 = vst [vmem:[#allocation2 + $0x78] sm:$0xff] %v2419
    // Predicated region
    $region30: #{tpu_custom_call.1} parent=1 // pred_check
      %p2436 = pneg %p54
    $region31: #{tpu_custom_call.1} parent=1 // pred_check_branch
      %2438 = sbr.rel (%p2436) target = $region33
    $region32: #{tpu_custom_call.1} parent=1 // pred_region
      %v2439 = vld [vmem:[#allocation2] sm:$0xff]
      %v2440 = vld [vmem:[#allocation2 + $0x8] sm:$0xff]
      %v2441 = vld [vmem:[#allocation2 + $0x10] sm:$0xff]
      %v2442 = vld [vmem:[#allocation2 + $0x18] sm:$0xff]
      %v2443 = vld [vmem:[#allocation2 + $0x20] sm:$0xff]
      %v2444 = vld [vmem:[#allocation2 + $0x28] sm:$0xff]
      %v2445 = vld [vmem:[#allocation2 + $0x30] sm:$0xff]
      %v2446 = vld [vmem:[#allocation2 + $0x38] sm:$0xff]
      %v2447 = vld [vmem:[#allocation2 + $0x40] sm:$0xff]
      %v2448 = vld [vmem:[#allocation2 + $0x48] sm:$0xff]
      %v2449 = vld [vmem:[#allocation2 + $0x50] sm:$0xff]
      %v2450 = vld [vmem:[#allocation2 + $0x58] sm:$0xff]
      %v2451 = vld [vmem:[#allocation2 + $0x60] sm:$0xff]
      %v2452 = vld [vmem:[#allocation2 + $0x68] sm:$0xff]
      %v2453 = vld [vmem:[#allocation2 + $0x70] sm:$0xff]
      %v2454 = vld [vmem:[#allocation2 + $0x78] sm:$0xff]
      %v2455 = vmax.f32 %v2439, 0.0
      %v2456 = vmax.f32 %v2440, 0.0
      %v2457 = vmax.f32 %v2441, 0.0
      %v2458 = vmax.f32 %v2442, 0.0
      %v2459 = vmax.f32 %v2443, 0.0
      %v2460 = vmax.f32 %v2444, 0.0
      %v2461 = vmax.f32 %v2445, 0.0
      %v2462 = vmax.f32 %v2446, 0.0
      %v2463 = vmax.f32 %v2447, 0.0
      %v2464 = vmax.f32 %v2448, 0.0
      %v2465 = vmax.f32 %v2449, 0.0
      %v2466 = vmax.f32 %v2450, 0.0
      %v2467 = vmax.f32 %v2451, 0.0
      %v2468 = vmax.f32 %v2452, 0.0
      %v2469 = vmax.f32 %v2453, 0.0
      %v2470 = vmax.f32 %v2454, 0.0
      %2471 = vst [vmem:[#allocation9] sm:$0xff] %v2455
      %2472 = vst [vmem:[#allocation9 + $0x8] sm:$0xff] %v2456
      %2473 = vst [vmem:[#allocation9 + $0x10] sm:$0xff] %v2457
      %2474 = vst [vmem:[#allocation9 + $0x18] sm:$0xff] %v2458
      %2475 = vst [vmem:[#allocation9 + $0x20] sm:$0xff] %v2459
      %2476 = vst [vmem:[#allocation9 + $0x28] sm:$0xff] %v2460
      %2477 = vst [vmem:[#allocation9 + $0x30] sm:$0xff] %v2461
      %2478 = vst [vmem:[#allocation9 + $0x38] sm:$0xff] %v2462
      %2479 = vst [vmem:[#allocation9 + $0x40] sm:$0xff] %v2463
      %2480 = vst [vmem:[#allocation9 + $0x48] sm:$0xff] %v2464
      %2481 = vst [vmem:[#allocation9 + $0x50] sm:$0xff] %v2465
      %2482 = vst [vmem:[#allocation9 + $0x58] sm:$0xff] %v2466
      %2483 = vst [vmem:[#allocation9 + $0x60] sm:$0xff] %v2467
      %2484 = vst [vmem:[#allocation9 + $0x68] sm:$0xff] %v2468
      %2485 = vst [vmem:[#allocation9 + $0x70] sm:$0xff] %v2469
      %2486 = vst [vmem:[#allocation9 + $0x78] sm:$0xff] %v2470
    $region33: #{tpu_custom_call.1} parent=1 // pred_fallthru
      _
    // Predicated region
    $region34: #{tpu_custom_call.1} parent=1 // pred_check
      _
    $region35: #{tpu_custom_call.1} parent=1 // pred_check_branch
      %2488 = sbr.rel (0) target = $region37
    $region36: #{tpu_custom_call.1} parent=1 // pred_region
      %s2490 = ssub.s32 2048, 2048
      %2491 = vsyncadd [#allocation5], %s2490
      %s2492 = sshll.u32 [#allocation9], 4
      %s2493 = int_to_ptr.vmem [resolvable:$true] %s2492
      %2498 = dma.vmem_to_hbm [thread:$0]  %s2493, 2048, %s3, [#allocation5], 1024, 1024, 64
    $region37: #{tpu_custom_call.1} parent=1 // pred_fallthru
      _
    // Predicated region
    $region38: #{tpu_custom_call.1} parent=1 // pred_check
      _
    $region39: #{tpu_custom_call.1} parent=1 // pred_check_branch
      %2500 = sbr.rel (0) target = $region41
    $region40: #{tpu_custom_call.1} parent=1 // pred_region
      %2501 = dma.done [#allocation5], 2048
    $region41: #{tpu_custom_call.1} parent=1 // pred_fallthru
      _
    %2502 = vsyncpa [#allocation4], 1
    %2503 = vsyncpa [#allocation7], 1
    %2504 = vsyncpa [#allocation5], 1

</llo_original>
